<compile_context>
chip_gen: v6e
topology: v6e:2x2x1
jax: 0.10.0
libtpu: 0.0.40
codegen_flags: <defaults>
</compile_context>

<pallas_src>
import functools

import jax
import jax.numpy as jnp
from jax.experimental import pallas as pl
from jax.experimental.pallas import tpu as pltpu

NEG_SLOPE = 0.01   # nn.LeakyReLU default
LN_EPS = 1e-5      # nn.LayerNorm default
LANE = 128         # TPU lane width; feature dims are zero-padded to this

# Row / K tile of the normalized adjacency. 128x128 bf16 tiles (double
# buffered) keep the per-layer working set far under v7x's 64 MiB VMEM;
# sweep larger (256/512) on v5e/v6e (128 MiB) for big graphs.
TILE_M = 128
TILE_K = 128


def _round_up(x, m):
    return (x + m - 1) // m * m


def _leaky_relu(x):
    return jnp.where(x >= 0, x, NEG_SLOPE * x)


def _layernorm_onepass(x, gamma, beta, d_real):
    # One-pass stats. Padded feature columns of x are exactly zero (padded W
    # columns / bias are zero), so summing over the full padded lane group and
    # dividing by the real width is exact.
    s = jnp.sum(x, axis=-1, keepdims=True)
    sq = jnp.sum(x * x, axis=-1, keepdims=True)
    mu = s / d_real
    var = sq / d_real - mu * mu
    return (x - mu) * jax.lax.rsqrt(var + LN_EPS) * gamma + beta


def graphconv_kernel(a_ref, h_ref, w_ref, b_ref, g_ref, be_ref,
                     o_ref, acc_ref, *, d_out_real, apply_norm):
    """One GraphConv layer: o = [LeakyReLU(LN(.))](A_hat @ H @ W + b).

    grid = (row tiles of A_hat, K tiles over neighbors). A_tile @ H_tile
    accumulates into f32 scratch; projection + bias (+ LN + LeakyReLU) are
    fused into the last K step of each row tile.
    """
    k = pl.program_id(1)

    @pl.when(k == 0)
    def _():
        acc_ref[...] = jnp.zeros_like(acc_ref)

    # Aggregation: (TM, TK) bf16 @ (TK, Din) bf16 -> f32 accumulate on MXU.
    acc_ref[...] += jnp.dot(a_ref[...], h_ref[...],
                            preferred_element_type=jnp.float32)

    @pl.when(k == pl.num_programs(1) - 1)
    def _():
        # Projection once per row tile: (TM, Din) @ (Din, Dout) + b.
        z = jnp.dot(acc_ref[...].astype(jnp.bfloat16), w_ref[...],
                    preferred_element_type=jnp.float32) + b_ref[...]
        if apply_norm:
            z = _leaky_relu(_layernorm_onepass(z, g_ref[...], be_ref[...],
                                               d_out_real))
        # dropout -> identity (eval mode)
        o_ref[...] = z.astype(o_ref.dtype)


def graphconv_layer(a_bf16, h, w, b, gamma, beta, *,
                    d_out_real, apply_norm, out_dtype):
    n_pad = a_bf16.shape[0]
    din = h.shape[1]
    dout = w.shape[1]
    grid = (n_pad // TILE_M, n_pad // TILE_K)

    kern = functools.partial(graphconv_kernel,
                             d_out_real=d_out_real, apply_norm=apply_norm)

    flops = 2 * n_pad * n_pad * din + 2 * n_pad * din * dout
    bytes_accessed = (a_bf16.size * 2                 # A tiles, read once
                      + h.size * 2 * grid[0]          # H re-read per row tile
                      + w.size * 2 + 3 * dout * 4     # weights / b / gamma / beta
                      + n_pad * dout * jnp.dtype(out_dtype).itemsize)

    return pl.pallas_call(
        kern,
        out_shape=jax.ShapeDtypeStruct((n_pad, dout), out_dtype),
        grid_spec=pltpu.PrefetchScalarGridSpec(
            num_scalar_prefetch=0,
            grid=grid,
            in_specs=[
                pl.BlockSpec((TILE_M, TILE_K), lambda i, k: (i, k)),   # A_hat
                pl.BlockSpec((TILE_K, din), lambda i, k: (k, 0)),      # H
                pl.BlockSpec((din, dout), lambda i, k: (0, 0)),        # W
                pl.BlockSpec((1, dout), lambda i, k: (0, 0)),          # b
                pl.BlockSpec((1, dout), lambda i, k: (0, 0)),          # gamma
                pl.BlockSpec((1, dout), lambda i, k: (0, 0)),          # beta
            ],
            out_specs=pl.BlockSpec((TILE_M, dout), lambda i, k: (i, 0)),
            scratch_shapes=[pltpu.VMEM((TILE_M, din), jnp.float32)],
        ),
        compiler_params=pltpu.CompilerParams(
            dimension_semantics=("parallel", "arbitrary")),
        cost_estimate=pl.CostEstimate(flops=flops, transcendentals=0,
                                      bytes_accessed=bytes_accessed),
    )(a_bf16, h, w, b, gamma, beta)


def _pad2d(x, rows, cols, dtype):
    out = jnp.zeros((rows, cols), dtype)
    return out.at[:x.shape[0], :x.shape[1]].set(x.astype(dtype))


def fraud_gnn_forward(a_hat, x, params):
    n, in_dim = x.shape
    hidden_dim = params["w1"].shape[1]
    out_dim = params["w3"].shape[1]

    n_pad = _round_up(n, max(TILE_M, TILE_K))
    din_p = _round_up(in_dim, LANE)
    dh_p = _round_up(hidden_dim, LANE)
    dout_p = _round_up(out_dim, LANE)

    # Zero-pad to lane-dense / tile-aligned shapes; bf16 for the MXU operands.
    a_p = _pad2d(a_hat, n_pad, n_pad, jnp.bfloat16)
    x_p = _pad2d(x, n_pad, din_p, jnp.bfloat16)

    w1 = _pad2d(params["w1"], din_p, dh_p, jnp.bfloat16)
    w2 = _pad2d(params["w2"], dh_p, dh_p, jnp.bfloat16)
    w3 = _pad2d(params["w3"], dh_p, dout_p, jnp.bfloat16)
    b1 = _pad2d(params["b1"], 1, dh_p, jnp.float32)
    b2 = _pad2d(params["b2"], 1, dh_p, jnp.float32)
    b3 = _pad2d(params["b3"], 1, dout_p, jnp.float32)
    g1 = _pad2d(params["g1"], 1, dh_p, jnp.float32)
    g2 = _pad2d(params["g2"], 1, dh_p, jnp.float32)
    be1 = _pad2d(params["be1"], 1, dh_p, jnp.float32)
    be2 = _pad2d(params["be2"], 1, dh_p, jnp.float32)
    ln_dummy = jnp.zeros((1, dout_p), jnp.float32)   # unused (apply_norm=False)

    h = graphconv_layer(a_p, x_p, w1, b1, g1, be1,
                        d_out_real=hidden_dim, apply_norm=True,
                        out_dtype=jnp.bfloat16)
    # TODO(synk): training-mode dropout not emitted (eval-mode identity).
    h = graphconv_layer(a_p, h, w2, b2, g2, be2,
                        d_out_real=hidden_dim, apply_norm=True,
                        out_dtype=jnp.bfloat16)
    out = graphconv_layer(a_p, h, w3, b3, ln_dummy, ln_dummy,
                          d_out_real=out_dim, apply_norm=False,
                          out_dtype=jnp.float32)
    return out[:n, :out_dim]


# ----------------------------------------------------------------------------
# init / glue / reference
# ----------------------------------------------------------------------------
def xavier_uniform(key, shape):
    fan_in, fan_out = shape
    bound = (6.0 / (fan_in + fan_out)) ** 0.5
    return jax.random.uniform(key, shape, jnp.float32, -bound, bound)


def init_params(key, in_dim, hidden_dim, out_dim):
    k1, k2, k3 = jax.random.split(key, 3)
    return {
        # GraphConv: Xavier-uniform weight, zero bias (DGL defaults)
        "w1": xavier_uniform(k1, (in_dim, hidden_dim)),
        "b1": jnp.zeros((1, hidden_dim), jnp.float32),
        "w2": xavier_uniform(k2, (hidden_dim, hidden_dim)),
        "b2": jnp.zeros((1, hidden_dim), jnp.float32),
        "w3": xavier_uniform(k3, (hidden_dim, out_dim)),
        "b3": jnp.zeros((1, out_dim), jnp.float32),
        # LayerNorm: ones / zeros (PyTorch defaults)
        "g1": jnp.ones((1, hidden_dim), jnp.float32),
        "be1": jnp.zeros((1, hidden_dim), jnp.float32),
        "g2": jnp.ones((1, hidden_dim), jnp.float32),
        "be2": jnp.zeros((1, hidden_dim), jnp.float32),
    }


def build_normalized_adjacency(key, n):
    # random symmetric 0/1 adjacency, no self loops; DGL norm='both' default:
    # A_hat = D^{-1/2} A D^{-1/2}, degrees clamped to >= 1.
    upper = (jax.random.uniform(key, (n, n)) < 0.15).astype(jnp.float32)
    a = jnp.triu(upper, k=1)
    a = a + a.T
    deg = jnp.clip(a.sum(axis=1), 1.0, None)
    d_inv_sqrt = deg ** -0.5
    return d_inv_sqrt[:, None] * a * d_inv_sqrt[None, :]


def reference_forward(a_hat, x, params):
    """Pure-JAX reference with the same bf16-in / f32-accumulate numerics."""
    a = a_hat.astype(jnp.bfloat16)

    def conv(h, w, b):
        agg = jnp.dot(a, h.astype(jnp.bfloat16),
                      preferred_element_type=jnp.float32)
        return jnp.dot(agg.astype(jnp.bfloat16), w.astype(jnp.bfloat16),
                       preferred_element_type=jnp.float32) + b

    def ln_act(z, g, be):
        mu = jnp.mean(z, axis=-1, keepdims=True)
        var = jnp.mean((z - mu) ** 2, axis=-1, keepdims=True)
        z = (z - mu) * jax.lax.rsqrt(var + LN_EPS) * g + be
        return jnp.where(z >= 0, z, NEG_SLOPE * z)

    h = ln_act(conv(x, params["w1"], params["b1"]),
               params["g1"], params["be1"]).astype(jnp.bfloat16)
    h = ln_act(conv(h, params["w2"], params["b2"]),
               params["g2"], params["be2"]).astype(jnp.bfloat16)
    return conv(h, params["w3"], params["b3"])


if __name__ == "__main__":
    N, IN_DIM, HIDDEN, OUT_DIM = 256, 16, 32, 8

    key = jax.random.PRNGKey(0)
    k_feat, k_adj, k_param = jax.random.split(key, 3)

    features = jax.random.normal(k_feat, (N, IN_DIM), jnp.float32)
    a_hat = build_normalized_adjacency(k_adj, N)
    params = init_params(k_param, IN_DIM, HIDDEN, OUT_DIM)

    forward = jax.jit(fraud_gnn_forward)
    out = forward(a_hat, features, params)
    jax.block_until_ready(out)
    assert out.shape == (N, OUT_DIM) and out.dtype == jnp.float32

    ref = reference_forward(a_hat, features, params)
    err = float(jnp.max(jnp.abs(out - ref)))
    assert err < 5e-2, f"kernel/reference mismatch: max abs err = {err}"

    print("KERNEL_OK")
</pallas_src>

<mosaic_0001>
module attributes {stable_mosaic.version = 11 : i64} {
  func.func @graphconv_kernel(%arg0: i32, %arg1: i32, %arg2: memref<128x128xbf16, #tpu.memory_space<vmem>>, %arg3: memref<128x128xbf16, #tpu.memory_space<vmem>>, %arg4: memref<128x128xbf16, #tpu.memory_space<vmem>>, %arg5: memref<1x128xf32, #tpu.memory_space<vmem>>, %arg6: memref<1x128xf32, #tpu.memory_space<vmem>>, %arg7: memref<1x128xf32, #tpu.memory_space<vmem>>, %arg8: memref<128x128xbf16, #tpu.memory_space<vmem>>, %arg9: memref<128x128xf32, #tpu.memory_space<vmem>>) attributes {dimension_semantics = [#tpu.dimension_semantics<parallel>, #tpu.dimension_semantics<arbitrary>], iteration_bounds = array<i64: 2, 2>, scalar_prefetch = 0 : i64, scratch_operands = 1 : i64, tpu.core_type = #tpu.core_type<tc>, window_params = [{transform_indices = @transform_0, window_bounds = array<i64: 128, 128>}, {transform_indices = @transform_1, window_bounds = array<i64: 128, 128>}, {pipeline_mode = #tpu.pipeline_mode<synchronous>, transform_indices = @transform_2, window_bounds = array<i64: 128, 128>}, {pipeline_mode = #tpu.pipeline_mode<synchronous>, transform_indices = @transform_3, window_bounds = array<i64: 1, 128>}, {pipeline_mode = #tpu.pipeline_mode<synchronous>, transform_indices = @transform_4, window_bounds = array<i64: 1, 128>}, {pipeline_mode = #tpu.pipeline_mode<synchronous>, transform_indices = @transform_5, window_bounds = array<i64: 1, 128>}, {transform_indices = @transform_6, window_bounds = array<i64: 128, 128>}]} {
    %c0_i32 = arith.constant 0 : i32
    %0 = arith.cmpi eq, %arg1, %c0_i32 : i32
    %1 = arith.extui %0 : i1 to i32
    %c0_i32_0 = arith.constant 0 : i32
    %2 = arith.cmpi ne, %1, %c0_i32_0 : i32
    scf.if %2 {
      %cst_9 = arith.constant 0.000000e+00 : f32
      %12 = vector.broadcast %cst_9 : f32 to vector<128x128xf32>
      %c0_10 = arith.constant 0 : index
      %c0_11 = arith.constant 0 : index
      %13 = vector.load %arg9[%c0_10, %c0_11] : memref<128x128xf32, #tpu.memory_space<vmem>>, vector<128x128xf32>
      tpu.vector_store %arg9[%c0_10, %c0_11], %12 {strides = array<i32>} : memref<128x128xf32, #tpu.memory_space<vmem>>, vector<128x128xf32>,
    } else {
    }
    %c0 = arith.constant 0 : index
    %c0_1 = arith.constant 0 : index
    %3 = vector.load %arg9[%c0, %c0_1] : memref<128x128xf32, #tpu.memory_space<vmem>>, vector<128x128xf32>
    %c0_2 = arith.constant 0 : index
    %c0_3 = arith.constant 0 : index
    %4 = vector.load %arg2[%c0_2, %c0_3] : memref<128x128xbf16, #tpu.memory_space<vmem>>, vector<128x128xbf16>
    %c0_4 = arith.constant 0 : index
    %c0_5 = arith.constant 0 : index
    %5 = vector.load %arg3[%c0_4, %c0_5] : memref<128x128xbf16, #tpu.memory_space<vmem>>, vector<128x128xbf16>
    %cst = arith.constant dense<0.000000e+00> : vector<128x128xf32>
    %6 = tpu.matmul %4, %5, %cst {dimension_numbers = #tpu.dot_dimension_numbers<[1], [0], [0], [1], [0, 0, 1, 1], [], []>} : vector<128x128xbf16>, vector<128x128xbf16>, vector<128x128xf32> -> vector<128x128xf32>
    %7 = arith.addf %3, %6 : vector<128x128xf32>
    %c0_6 = arith.constant 0 : index
    %c0_7 = arith.constant 0 : index
    %8 = vector.load %arg9[%c0_6, %c0_7] : memref<128x128xf32, #tpu.memory_space<vmem>>, vector<128x128xf32>
    tpu.vector_store %arg9[%c0_6, %c0_7], %7 {strides = array<i32>} : memref<128x128xf32, #tpu.memory_space<vmem>>, vector<128x128xf32>,
    %c1_i32 = arith.constant 1 : i32
    %9 = arith.cmpi eq, %arg1, %c1_i32 : i32
    %10 = arith.extui %9 : i1 to i32
    %c0_i32_8 = arith.constant 0 : i32
    %11 = arith.cmpi ne, %10, %c0_i32_8 : i32
    scf.if %11 {
      %c0_9 = arith.constant 0 : index
      %c0_10 = arith.constant 0 : index
      %12 = vector.load %arg9[%c0_9, %c0_10] : memref<128x128xf32, #tpu.memory_space<vmem>>, vector<128x128xf32>
      %13 = arith.truncf %12 : vector<128x128xf32> to vector<128x128xbf16>
      %c0_11 = arith.constant 0 : index
      %c0_12 = arith.constant 0 : index
      %14 = vector.load %arg4[%c0_11, %c0_12] : memref<128x128xbf16, #tpu.memory_space<vmem>>, vector<128x128xbf16>
      %cst_13 = arith.constant dense<0.000000e+00> : vector<128x128xf32>
      %15 = tpu.matmul %13, %14, %cst_13 {dimension_numbers = #tpu.dot_dimension_numbers<[1], [0], [0], [1], [0, 0, 1, 1], [], []>} : vector<128x128xbf16>, vector<128x128xbf16>, vector<128x128xf32> -> vector<128x128xf32>
      %c0_14 = arith.constant 0 : index
      %c0_15 = arith.constant 0 : index
      %16 = vector.load %arg5[%c0_14, %c0_15] : memref<1x128xf32, #tpu.memory_space<vmem>>, vector<1x128xf32>
      %17 = vector.broadcast %16 : vector<1x128xf32> to vector<128x128xf32>
      %18 = arith.addf %15, %17 : vector<128x128xf32>
      %c0_16 = arith.constant 0 : index
      %c0_17 = arith.constant 0 : index
      %19 = vector.load %arg6[%c0_16, %c0_17] : memref<1x128xf32, #tpu.memory_space<vmem>>, vector<1x128xf32>
      %c0_18 = arith.constant 0 : index
      %c0_19 = arith.constant 0 : index
      %20 = vector.load %arg7[%c0_18, %c0_19] : memref<1x128xf32, #tpu.memory_space<vmem>>, vector<1x128xf32>
      %cst_20 = arith.constant dense<0.000000e+00> : vector<128xf32>
      %21 = vector.multi_reduction <add>, %18, %cst_20 [1] : vector<128x128xf32> to vector<128xf32>
      %22 = vector.shape_cast %21 : vector<128xf32> to vector<128x1xf32>
      %23 = arith.mulf %18, %18 : vector<128x128xf32>
      %cst_21 = arith.constant dense<0.000000e+00> : vector<128xf32>
      %24 = vector.multi_reduction <add>, %23, %cst_21 [1] : vector<128x128xf32> to vector<128xf32>
      %25 = vector.shape_cast %24 : vector<128xf32> to vector<128x1xf32>
      %cst_22 = arith.constant 3.200000e+01 : f32
      %26 = vector.broadcast %cst_22 : f32 to vector<128x1xf32>
      %27 = arith.divf %22, %26 : vector<128x1xf32>
      %cst_23 = arith.constant 3.200000e+01 : f32
      %28 = vector.broadcast %cst_23 : f32 to vector<128x1xf32>
      %29 = arith.divf %25, %28 : vector<128x1xf32>
      %30 = arith.mulf %27, %27 : vector<128x1xf32>
      %31 = arith.subf %29, %30 : vector<128x1xf32>
      %32 = vector.broadcast %27 : vector<128x1xf32> to vector<128x128xf32>
      %33 = arith.subf %18, %32 : vector<128x128xf32>
      %cst_24 = arith.constant 9.99999974E-6 : f32
      %34 = vector.broadcast %cst_24 : f32 to vector<128x1xf32>
      %35 = arith.addf %31, %34 : vector<128x1xf32>
      %36 = math.rsqrt %35 : vector<128x1xf32>
      %37 = vector.broadcast %36 : vector<128x1xf32> to vector<128x128xf32>
      %38 = arith.mulf %33, %37 : vector<128x128xf32>
      %39 = vector.broadcast %19 : vector<1x128xf32> to vector<128x128xf32>
      %40 = arith.mulf %38, %39 : vector<128x128xf32>
      %41 = vector.broadcast %20 : vector<1x128xf32> to vector<128x128xf32>
      %42 = arith.addf %40, %41 : vector<128x128xf32>
      %cst_25 = arith.constant 0.000000e+00 : f32
      %43 = vector.broadcast %cst_25 : f32 to vector<128x128xf32>
      %44 = arith.cmpf oge, %42, %43 : vector<128x128xf32>
      %cst_26 = arith.constant 0.00999999977 : f32
      %45 = vector.broadcast %cst_26 : f32 to vector<128x128xf32>
      %46 = arith.mulf %45, %42 : vector<128x128xf32>
      %47 = arith.select %44, %42, %46 : vector<128x128xi1>, vector<128x128xf32>
      %48 = arith.truncf %47 : vector<128x128xf32> to vector<128x128xbf16>
      %c0_27 = arith.constant 0 : index
      %c0_28 = arith.constant 0 : index
      %49 = vector.load %arg8[%c0_27, %c0_28] : memref<128x128xbf16, #tpu.memory_space<vmem>>, vector<128x128xbf16>
      tpu.vector_store %arg8[%c0_27, %c0_28], %48 {strides = array<i32>} : memref<128x128xbf16, #tpu.memory_space<vmem>>, vector<128x128xbf16>,
    } else {
    }
    return
  }
  func.func @transform_0(%arg0: i32, %arg1: i32) -> (i32, i32) {
    %c0_i32 = arith.constant 0 : i32
    return %arg0, %arg1 : i32, i32
  }
  func.func @transform_1(%arg0: i32, %arg1: i32) -> (i32, i32) {
    %c0_i32 = arith.constant 0 : i32
    %c0_i32_0 = arith.constant 0 : i32
    return %arg1, %c0_i32 : i32, i32
  }
  func.func @transform_2(%arg0: i32, %arg1: i32) -> (i32, i32) {
    %c0_i32 = arith.constant 0 : i32
    %c0_i32_0 = arith.constant 0 : i32
    %c0_i32_1 = arith.constant 0 : i32
    return %c0_i32, %c0_i32_0 : i32, i32
  }
  func.func @transform_3(%arg0: i32, %arg1: i32) -> (i32, i32) {
    %c0_i32 = arith.constant 0 : i32
    %c0_i32_0 = arith.constant 0 : i32
    %c0_i32_1 = arith.constant 0 : i32
    return %c0_i32, %c0_i32_0 : i32, i32
  }
  func.func @transform_4(%arg0: i32, %arg1: i32) -> (i32, i32) {
    %c0_i32 = arith.constant 0 : i32
    %c0_i32_0 = arith.constant 0 : i32
    %c0_i32_1 = arith.constant 0 : i32
    return %c0_i32, %c0_i32_0 : i32, i32
  }
  func.func @transform_5(%arg0: i32, %arg1: i32) -> (i32, i32) {
    %c0_i32 = arith.constant 0 : i32
    %c0_i32_0 = arith.constant 0 : i32
    %c0_i32_1 = arith.constant 0 : i32
    return %c0_i32, %c0_i32_0 : i32, i32
  }
  func.func @transform_6(%arg0: i32, %arg1: i32) -> (i32, i32) {
    %c0_i32 = arith.constant 0 : i32
    %c0_i32_0 = arith.constant 0 : i32
    return %arg0, %c0_i32 : i32, i32
  }
}

module attributes {stable_mosaic.version = 11 : i64} {
  func.func @graphconv_kernel(%arg0: i32, %arg1: i32, %arg2: memref<128x128xbf16, #tpu.memory_space<vmem>>, %arg3: memref<128x128xbf16, #tpu.memory_space<vmem>>, %arg4: memref<128x128xbf16, #tpu.memory_space<vmem>>, %arg5: memref<1x128xf32, #tpu.memory_space<vmem>>, %arg6: memref<1x128xf32, #tpu.memory_space<vmem>>, %arg7: memref<1x128xf32, #tpu.memory_space<vmem>>, %arg8: memref<128x128xf32, #tpu.memory_space<vmem>>, %arg9: memref<128x128xf32, #tpu.memory_space<vmem>>) attributes {dimension_semantics = [#tpu.dimension_semantics<parallel>, #tpu.dimension_semantics<arbitrary>], iteration_bounds = array<i64: 2, 2>, scalar_prefetch = 0 : i64, scratch_operands = 1 : i64, tpu.core_type = #tpu.core_type<tc>, window_params = [{transform_indices = @transform_0, window_bounds = array<i64: 128, 128>}, {transform_indices = @transform_1, window_bounds = array<i64: 128, 128>}, {pipeline_mode = #tpu.pipeline_mode<synchronous>, transform_indices = @transform_2, window_bounds = array<i64: 128, 128>}, {pipeline_mode = #tpu.pipeline_mode<synchronous>, transform_indices = @transform_3, window_bounds = array<i64: 1, 128>}, {pipeline_mode = #tpu.pipeline_mode<synchronous>, transform_indices = @transform_4, window_bounds = array<i64: 1, 128>}, {pipeline_mode = #tpu.pipeline_mode<synchronous>, transform_indices = @transform_5, window_bounds = array<i64: 1, 128>}, {transform_indices = @transform_6, window_bounds = array<i64: 128, 128>}]} {
    %c0_i32 = arith.constant 0 : i32
    %0 = arith.cmpi eq, %arg1, %c0_i32 : i32
    %1 = arith.extui %0 : i1 to i32
    %c0_i32_0 = arith.constant 0 : i32
    %2 = arith.cmpi ne, %1, %c0_i32_0 : i32
    scf.if %2 {
      %cst_9 = arith.constant 0.000000e+00 : f32
      %12 = vector.broadcast %cst_9 : f32 to vector<128x128xf32>
      %c0_10 = arith.constant 0 : index
      %c0_11 = arith.constant 0 : index
      %13 = vector.load %arg9[%c0_10, %c0_11] : memref<128x128xf32, #tpu.memory_space<vmem>>, vector<128x128xf32>
      tpu.vector_store %arg9[%c0_10, %c0_11], %12 {strides = array<i32>} : memref<128x128xf32, #tpu.memory_space<vmem>>, vector<128x128xf32>,
    } else {
    }
    %c0 = arith.constant 0 : index
    %c0_1 = arith.constant 0 : index
    %3 = vector.load %arg9[%c0, %c0_1] : memref<128x128xf32, #tpu.memory_space<vmem>>, vector<128x128xf32>
    %c0_2 = arith.constant 0 : index
    %c0_3 = arith.constant 0 : index
    %4 = vector.load %arg2[%c0_2, %c0_3] : memref<128x128xbf16, #tpu.memory_space<vmem>>, vector<128x128xbf16>
    %c0_4 = arith.constant 0 : index
    %c0_5 = arith.constant 0 : index
    %5 = vector.load %arg3[%c0_4, %c0_5] : memref<128x128xbf16, #tpu.memory_space<vmem>>, vector<128x128xbf16>
    %cst = arith.constant dense<0.000000e+00> : vector<128x128xf32>
    %6 = tpu.matmul %4, %5, %cst {dimension_numbers = #tpu.dot_dimension_numbers<[1], [0], [0], [1], [0, 0, 1, 1], [], []>} : vector<128x128xbf16>, vector<128x128xbf16>, vector<128x128xf32> -> vector<128x128xf32>
    %7 = arith.addf %3, %6 : vector<128x128xf32>
    %c0_6 = arith.constant 0 : index
    %c0_7 = arith.constant 0 : index
    %8 = vector.load %arg9[%c0_6, %c0_7] : memref<128x128xf32, #tpu.memory_space<vmem>>, vector<128x128xf32>
    tpu.vector_store %arg9[%c0_6, %c0_7], %7 {strides = array<i32>} : memref<128x128xf32, #tpu.memory_space<vmem>>, vector<128x128xf32>,
    %c1_i32 = arith.constant 1 : i32
    %9 = arith.cmpi eq, %arg1, %c1_i32 : i32
    %10 = arith.extui %9 : i1 to i32
    %c0_i32_8 = arith.constant 0 : i32
    %11 = arith.cmpi ne, %10, %c0_i32_8 : i32
    scf.if %11 {
      %c0_9 = arith.constant 0 : index
      %c0_10 = arith.constant 0 : index
      %12 = vector.load %arg9[%c0_9, %c0_10] : memref<128x128xf32, #tpu.memory_space<vmem>>, vector<128x128xf32>
      %13 = arith.truncf %12 : vector<128x128xf32> to vector<128x128xbf16>
      %c0_11 = arith.constant 0 : index
      %c0_12 = arith.constant 0 : index
      %14 = vector.load %arg4[%c0_11, %c0_12] : memref<128x128xbf16, #tpu.memory_space<vmem>>, vector<128x128xbf16>
      %cst_13 = arith.constant dense<0.000000e+00> : vector<128x128xf32>
      %15 = tpu.matmul %13, %14, %cst_13 {dimension_numbers = #tpu.dot_dimension_numbers<[1], [0], [0], [1], [0, 0, 1, 1], [], []>} : vector<128x128xbf16>, vector<128x128xbf16>, vector<128x128xf32> -> vector<128x128xf32>
      %c0_14 = arith.constant 0 : index
      %c0_15 = arith.constant 0 : index
      %16 = vector.load %arg5[%c0_14, %c0_15] : memref<1x128xf32, #tpu.memory_space<vmem>>, vector<1x128xf32>
      %17 = vector.broadcast %16 : vector<1x128xf32> to vector<128x128xf32>
      %18 = arith.addf %15, %17 : vector<128x128xf32>
      %c0_16 = arith.constant 0 : index
      %c0_17 = arith.constant 0 : index
      %19 = vector.load %arg8[%c0_16, %c0_17] : memref<128x128xf32, #tpu.memory_space<vmem>>, vector<128x128xf32>
      tpu.vector_store %arg8[%c0_16, %c0_17], %18 {strides = array<i32>} : memref<128x128xf32, #tpu.memory_space<vmem>>, vector<128x128xf32>,
    } else {
    }
    return
  }
  func.func @transform_0(%arg0: i32, %arg1: i32) -> (i32, i32) {
    %c0_i32 = arith.constant 0 : i32
    return %arg0, %arg1 : i32, i32
  }
  func.func @transform_1(%arg0: i32, %arg1: i32) -> (i32, i32) {
    %c0_i32 = arith.constant 0 : i32
    %c0_i32_0 = arith.constant 0 : i32
    return %arg1, %c0_i32 : i32, i32
  }
  func.func @transform_2(%arg0: i32, %arg1: i32) -> (i32, i32) {
    %c0_i32 = arith.constant 0 : i32
    %c0_i32_0 = arith.constant 0 : i32
    %c0_i32_1 = arith.constant 0 : i32
    return %c0_i32, %c0_i32_0 : i32, i32
  }
  func.func @transform_3(%arg0: i32, %arg1: i32) -> (i32, i32) {
    %c0_i32 = arith.constant 0 : i32
    %c0_i32_0 = arith.constant 0 : i32
    %c0_i32_1 = arith.constant 0 : i32
    return %c0_i32, %c0_i32_0 : i32, i32
  }
  func.func @transform_4(%arg0: i32, %arg1: i32) -> (i32, i32) {
    %c0_i32 = arith.constant 0 : i32
    %c0_i32_0 = arith.constant 0 : i32
    %c0_i32_1 = arith.constant 0 : i32
    return %c0_i32, %c0_i32_0 : i32, i32
  }
  func.func @transform_5(%arg0: i32, %arg1: i32) -> (i32, i32) {
    %c0_i32 = arith.constant 0 : i32
    %c0_i32_0 = arith.constant 0 : i32
    %c0_i32_1 = arith.constant 0 : i32
    return %c0_i32, %c0_i32_0 : i32, i32
  }
  func.func @transform_6(%arg0: i32, %arg1: i32) -> (i32, i32) {
    %c0_i32 = arith.constant 0 : i32
    %c0_i32_0 = arith.constant 0 : i32
    return %arg0, %c0_i32 : i32, i32
  }
}

</mosaic_0001>

<llo_original>
// kernel: fraud_gnn_forward.5
$region0: #{fraud_gnn_forward.5}
  #allocation0 [shape = 'u32[]', space=smem, size = 0x4, offset = 0x4, fixed_abs, tag = 'smem constant byte address 0x4 - core index']
  #allocation1 [shape = 'u32[144,128]{1,0:T(1,128)}', space=vmem, size = 0x12000, scoped, tag = 'internal scratch']
  #allocation2 [shape = 'f32[128,128]{1,0:T(8,128)}', space=vmem, size = 0x10000, scoped, tag = 'scratch operand']
  %s0 = inlined_call_operand.vmem [shape: bf16[256,256], index: 0, kind: input, shape index: {}]
  %s1 = inlined_call_operand.vmem [shape: bf16[256,128], index: 1, kind: input, shape index: {}]
  %s2 = inlined_call_operand.vmem [shape: bf16[128,128], index: 2, kind: input, shape index: {}]
  %s3 = inlined_call_operand.vmem [shape: f32[1,128], index: 3, kind: input, shape index: {}]
  %s4 = inlined_call_operand.vmem [shape: f32[1,128], index: 4, kind: input, shape index: {}, may-alias: {4,5}]
  %s5 = inlined_call_operand.vmem [shape: f32[1,128], index: 5, kind: input, shape index: {}, may-alias: {4,5}]
  %s6 = inlined_call_operand.vmem [shape: f32[256,128], index: 6, kind: output, shape index: {}]
  %s7 = sld [smem:[#allocation0]]
  $region106: #{fraud_gnn_forward.5} parent=0
    _
  %s9 = ssub.s32 1, %s7
  %s10 = scalar_select 0, %s9, %s7
  $region1: #{fraud_gnn_forward.5} parent=0
    #allocation3 [shape = 'u8[65536]{0}', space=vmem, size = 0x10000, scoped, tag = 'input window, operand 0']
    loop: start=0, step=1, limit=6
    $region2: #{fraud_gnn_forward.5} parent=1 // loop_pre_header
      _
    $region3: #{fraud_gnn_forward.5} parent=1 // loop_header
      %s12 = sphi 0, %s16
      %p13 = scmp.ge.s32.totalorder %s12, 6
      %s19 = sphi 0, %s31
      %s20 = sphi 0, %s27
      %s21 = sphi 0, %s19
      %s22 = sphi 0, %s20
      %s23 = sphi 0, %s21
      %s24 = sphi 0, %s22
      %s36 = sphi 0, %s38
      %s39 = sphi 0, %s36
      %s40 = sphi 0, %s39
      %s56 = sphi 0, %s40
      %s62 = sphi 0, %s64
      %s65 = sphi 0, %s62
      %s66 = sphi 0, %s65
      %s82 = sphi 0, %s66
      %s86 = sphi 0, %s86
      %s88 = sphi 0, %s86
      %s89 = sphi 0, %s88
      %s103 = sphi 0, %s89
      %s107 = sphi 0, %s107
      %s109 = sphi 0, %s107
      %s110 = sphi 0, %s109
      %s124 = sphi 0, %s110
      %s128 = sphi 0, %s128
      %s130 = sphi 0, %s128
      %s131 = sphi 0, %s130
      %s145 = sphi 0, %s131
      %s149 = sphi 0, %s149
      %s151 = sphi 0, %s149
      %s152 = sphi 0, %s151
      %s166 = sphi 0, %s152
      %s172 = sphi 0, %s174
      %s175 = sphi 0, %s172
      %s176 = sphi 0, %s175
      %s192 = sphi 0, %s176
    $region4: #{fraud_gnn_forward.5} parent=1 // loop_header_branch
      %15 = sbr.rel (%p13) target = $region8
    $region5: #{fraud_gnn_forward.5} parent=1 // loop_body
      %s17 = ssub.s32 %s12, 1
      %s18 = ssub.s32 %s12, 2
      %s25 = sadd.s32 1, %s20
      %p26 = scmp.ge.s32.totalorder %s25, 2
      %s27 = scalar_select %p26, 0, %s25
      %s28 = sadd.s32 1, %s19
      %s29 = scalar_select %p26, %s28, %s19
      %p30 = scmp.ge.s32.totalorder %s29, 2
      %s31 = scalar_select %p30, 0, %s29
      %s32 = ssub.s32 %s19, %s31
      %s33 = ssub.s32 %s20, %s27
      %s34 = sor.u32 %s32, %s33
      %p35 = scmp.eq.s32.totalorder %s34, 0
      %s37 = sadd.s32 %s36, 1
      %s38 = scalar_select %p35, %s36, %s37
      %p41 = pneg %p35
      %p42 = scmp.eq.s32.totalorder %s12, 3
      %p43 = por %p41, %p42
      %p44 = scmp.ne.s32.totalorder %s36, %s39
      %p45 = scmp.eq.s32.totalorder %s12, 0
      %p46 = por %p44, %p45
      %p47 = scmp.ne.s32.totalorder %s36, %s39
      %p48 = scmp.eq.s32.totalorder %s17, 3
      %p49 = por %p47, %p48
      %p50 = scmp.ne.s32.totalorder %s39, %s40
      %p51 = scmp.eq.s32.totalorder %s17, 0
      %p52 = por %p50, %p51
      %p53 = scmp.ne.s32.totalorder %s39, %s40
      %p54 = scmp.eq.s32.totalorder %s18, 3
      %p55 = por %p53, %p54
      %p57 = scmp.ne.s32.totalorder %s40, %s56
      %p58 = scmp.eq.s32.totalorder %s18, 0
      %p59 = por %p57, %p58
      %s60 = ssub.s32 %s20, %s27
      %p61 = scmp.eq.s32.totalorder %s60, 0
      %s63 = sadd.s32 %s62, 1
      %s64 = scalar_select %p61, %s62, %s63
      %p67 = pneg %p61
      %p68 = scmp.eq.s32.totalorder %s12, 3
      %p69 = por %p67, %p68
      %p70 = scmp.ne.s32.totalorder %s62, %s65
      %p71 = scmp.eq.s32.totalorder %s12, 0
      %p72 = por %p70, %p71
      %p73 = scmp.ne.s32.totalorder %s62, %s65
      %p74 = scmp.eq.s32.totalorder %s17, 3
      %p75 = por %p73, %p74
      %p76 = scmp.ne.s32.totalorder %s65, %s66
      %p77 = scmp.eq.s32.totalorder %s17, 0
      %p78 = por %p76, %p77
      %p79 = scmp.ne.s32.totalorder %s65, %s66
      %p80 = scmp.eq.s32.totalorder %s18, 3
      %p81 = por %p79, %p80
      %p83 = scmp.ne.s32.totalorder %s66, %s82
      %p84 = scmp.eq.s32.totalorder %s18, 0
      %p85 = por %p83, %p84
      %s87 = sadd.s32 %s86, 1
      %p90 = scmp.eq.s32.totalorder %s12, 3
      %p91 = scmp.ne.s32.totalorder %s86, %s88
      %p92 = scmp.eq.s32.totalorder %s12, 0
      %p93 = por %p91, %p92
      %p94 = scmp.ne.s32.totalorder %s86, %s88
      %p95 = scmp.eq.s32.totalorder %s17, 3
      %p96 = por %p94, %p95
      %p97 = scmp.ne.s32.totalorder %s88, %s89
      %p98 = scmp.eq.s32.totalorder %s17, 0
      %p99 = por %p97, %p98
      %p100 = scmp.ne.s32.totalorder %s88, %s89
      %p101 = scmp.eq.s32.totalorder %s18, 3
      %p102 = por %p100, %p101
      %p104 = scmp.ne.s32.totalorder %s89, %s103
      %p105 = scmp.eq.s32.totalorder %s18, 0
      %p106 = por %p104, %p105
      %s108 = sadd.s32 %s107, 1
      %p111 = scmp.eq.s32.totalorder %s12, 3
      %p112 = scmp.ne.s32.totalorder %s107, %s109
      %p113 = scmp.eq.s32.totalorder %s12, 0
      %p114 = por %p112, %p113
      %p115 = scmp.ne.s32.totalorder %s107, %s109
      %p116 = scmp.eq.s32.totalorder %s17, 3
      %p117 = por %p115, %p116
      %p118 = scmp.ne.s32.totalorder %s109, %s110
      %p119 = scmp.eq.s32.totalorder %s17, 0
      %p120 = por %p118, %p119
      %p121 = scmp.ne.s32.totalorder %s109, %s110
      %p122 = scmp.eq.s32.totalorder %s18, 3
      %p123 = por %p121, %p122
      %p125 = scmp.ne.s32.totalorder %s110, %s124
      %p126 = scmp.eq.s32.totalorder %s18, 0
      %p127 = por %p125, %p126
      %s129 = sadd.s32 %s128, 1
      %p132 = scmp.eq.s32.totalorder %s12, 3
      %p133 = scmp.ne.s32.totalorder %s128, %s130
      %p134 = scmp.eq.s32.totalorder %s12, 0
      %p135 = por %p133, %p134
      %p136 = scmp.ne.s32.totalorder %s128, %s130
      %p137 = scmp.eq.s32.totalorder %s17, 3
      %p138 = por %p136, %p137
      %p139 = scmp.ne.s32.totalorder %s130, %s131
      %p140 = scmp.eq.s32.totalorder %s17, 0
      %p141 = por %p139, %p140
      %p142 = scmp.ne.s32.totalorder %s130, %s131
      %p143 = scmp.eq.s32.totalorder %s18, 3
      %p144 = por %p142, %p143
      %p146 = scmp.ne.s32.totalorder %s131, %s145
      %p147 = scmp.eq.s32.totalorder %s18, 0
      %p148 = por %p146, %p147
      %s150 = sadd.s32 %s149, 1
      %p153 = scmp.eq.s32.totalorder %s12, 3
      %p154 = scmp.ne.s32.totalorder %s149, %s151
      %p155 = scmp.eq.s32.totalorder %s12, 0
      %p156 = por %p154, %p155
      %p157 = scmp.ne.s32.totalorder %s149, %s151
      %p158 = scmp.eq.s32.totalorder %s17, 3
      %p159 = por %p157, %p158
      %p160 = scmp.ne.s32.totalorder %s151, %s152
      %p161 = scmp.eq.s32.totalorder %s17, 0
      %p162 = por %p160, %p161
      %p163 = scmp.ne.s32.totalorder %s151, %s152
      %p164 = scmp.eq.s32.totalorder %s18, 3
      %p165 = por %p163, %p164
      %p167 = scmp.ne.s32.totalorder %s152, %s166
      %p168 = scmp.eq.s32.totalorder %s18, 0
      %p169 = por %p167, %p168
      %s170 = ssub.s32 %s19, %s31
      %p171 = scmp.eq.s32.totalorder %s170, 0
      %s173 = sadd.s32 %s172, 1
      %s174 = scalar_select %p171, %s172, %s173
      %p177 = pneg %p171
      %p178 = scmp.eq.s32.totalorder %s12, 3
      %p179 = por %p177, %p178
      %p180 = scmp.ne.s32.totalorder %s172, %s175
      %p181 = scmp.eq.s32.totalorder %s12, 0
      %p182 = por %p180, %p181
      %p183 = scmp.ne.s32.totalorder %s172, %s175
      %p184 = scmp.eq.s32.totalorder %s17, 3
      %p185 = por %p183, %p184
      %p186 = scmp.ne.s32.totalorder %s175, %s176
      %p187 = scmp.eq.s32.totalorder %s17, 0
      %p188 = por %p186, %p187
      %p189 = scmp.ne.s32.totalorder %s175, %s176
      %p190 = scmp.eq.s32.totalorder %s18, 3
      %p191 = por %p189, %p190
      %p193 = scmp.ne.s32.totalorder %s176, %s192
      %p194 = scmp.eq.s32.totalorder %s18, 0
      %p195 = por %p193, %p194
      %p196 = scmp.le.s32.totalorder 1, %s12
      %p197 = scmp.lt.s32.totalorder %s12, 5
      %p198 = pnand %p196, %p197
      %p199 = pneg %p198
      // Predicated region
      $region9: #{fraud_gnn_forward.5} parent=5 // pred_check
        _
      $region10: #{fraud_gnn_forward.5} parent=5 // pred_check_branch
        %201 = sbr.rel (%p198) target = $region12
      $region11: #{fraud_gnn_forward.5} parent=5 // pred_region
        %s202 = ssub.s32 %s12, 1
        // Predicated region
        $region13: #{fraud_gnn_forward.5} parent=11 // pred_check
          %p203 = pneg %p99
        $region14: #{fraud_gnn_forward.5} parent=11 // pred_check_branch
          %205 = sbr.rel (%p203) target = $region16
        $region15: #{fraud_gnn_forward.5} parent=11 // pred_region
          _
        $region16: #{fraud_gnn_forward.5} parent=11 // pred_fallthru
          _
        // Predicated region
        $region17: #{fraud_gnn_forward.5} parent=11 // pred_check
          %p206 = pneg %p120
        $region18: #{fraud_gnn_forward.5} parent=11 // pred_check_branch
          %208 = sbr.rel (%p206) target = $region20
        $region19: #{fraud_gnn_forward.5} parent=11 // pred_region
          _
        $region20: #{fraud_gnn_forward.5} parent=11 // pred_fallthru
          _
        // Predicated region
        $region21: #{fraud_gnn_forward.5} parent=11 // pred_check
          %p209 = pneg %p141
        $region22: #{fraud_gnn_forward.5} parent=11 // pred_check_branch
          %211 = sbr.rel (%p209) target = $region24
        $region23: #{fraud_gnn_forward.5} parent=11 // pred_region
          _
        $region24: #{fraud_gnn_forward.5} parent=11 // pred_fallthru
          _
        // Predicated region
        $region25: #{fraud_gnn_forward.5} parent=11 // pred_check
          %p212 = pneg %p162
        $region26: #{fraud_gnn_forward.5} parent=11 // pred_check_branch
          %214 = sbr.rel (%p212) target = $region28
        $region27: #{fraud_gnn_forward.5} parent=11 // pred_region
          _
        $region28: #{fraud_gnn_forward.5} parent=11 // pred_fallthru
          _
      $region12: #{fraud_gnn_forward.5} parent=5 // pred_fallthru
        _
      %p215 = scmp.lt.s32.totalorder %s12, 4
      // Predicated region
      $region29: #{fraud_gnn_forward.5} parent=5 // pred_check
        %p216 = pneg %p215
      $region30: #{fraud_gnn_forward.5} parent=5 // pred_check_branch
        %218 = sbr.rel (%p216) target = $region32
      $region31: #{fraud_gnn_forward.5} parent=5 // pred_region
        // Predicated region
        $region33: #{fraud_gnn_forward.5} parent=31 // pred_check
          %p219 = pneg %p46
        $region34: #{fraud_gnn_forward.5} parent=31 // pred_check_branch
          %221 = sbr.rel (%p219) target = $region36
        $region35: #{fraud_gnn_forward.5} parent=31 // pred_region
          %s222 = sand.u32 %s36, 1
          %s223 = sand.u32 %s36, 1
          %s224 = smul.addr %s223, 64
          %s225 = scalar_lea.vmem [#allocation3], %s224
          %s226 = smul.u32 16, %s19
          %s227 = smul.addr %s226, 2
          %s228 = sadd.s32 %s20, %s227
          %s229 = smul.addr %s228, 4
          %s230 = scalar_lea.vmem %s0, %s229
          // Predicated region
          $region37: #{fraud_gnn_forward.5} parent=35 // pred_check
            _
          $region38: #{fraud_gnn_forward.5} parent=35 // pred_check_branch
            %232 = sbr.rel (0) target = $region40
          $region39: #{fraud_gnn_forward.5} parent=35 // pred_region
            // Predicated region
            $region41: #{fraud_gnn_forward.5} parent=39 // pred_check
              _
            $region42: #{fraud_gnn_forward.5} parent=39 // pred_check_branch
              %234 = sbr.rel target = $region44
            $region43: #{fraud_gnn_forward.5} parent=39 // pred_region
              // Predicated region
              $region56: #{fraud_gnn_forward.5} parent=43 // pred_check
                _
              $region57: #{fraud_gnn_forward.5} parent=43 // pred_check_branch
                %280 = sbr.rel (0) target = $region59
              $region58: #{fraud_gnn_forward.5} parent=43 // pred_region
                loop: start=0, step=1, limit=1
                $region60: #{fraud_gnn_forward.5} parent=58 // loop_pre_header
                  _
                $region61: #{fraud_gnn_forward.5} parent=58 // loop_header
                  %s282 = sphi 0, %s286
                  %p283 = scmp.ge.s32.totalorder %s282, 1
                  %s287 = sphi %s230, %s230
                  %s288 = sphi %s225, %s225
                $region62: #{fraud_gnn_forward.5} parent=58 // loop_header_branch
                  %285 = sbr.rel (%p283) target = $region66
                $region63: #{fraud_gnn_forward.5} parent=58 // loop_body
                  _
                $region64: #{fraud_gnn_forward.5} parent=58 // loop_footer
                  %s286 = sadd.s32 1, %s282
                $region65: #{fraud_gnn_forward.5} parent=58 // loop_footer_branch
                  %281 = sbr.rel target = $region61
                $region66: #{fraud_gnn_forward.5} parent=58 // loop_exit
                  _
                %s290 = ssub.s32 16, 1
                loop: start=0, step=1, limit=1
                $region67: #{fraud_gnn_forward.5} parent=58 // loop_pre_header
                  _
                $region68: #{fraud_gnn_forward.5} parent=58 // loop_header
                  %s292 = sphi 0, %s296
                  %p293 = scmp.ge.s32.totalorder %s292, 1
                  %s297 = sphi %s230, %s230
                  %s298 = sphi %s225, %s225
                $region69: #{fraud_gnn_forward.5} parent=58 // loop_header_branch
                  %295 = sbr.rel (%p293) target = $region73
                $region70: #{fraud_gnn_forward.5} parent=58 // loop_body
                  %v299 = vld [vmem:[%s297] sm:%s290]
                  %300 = vst [vmem:[%s298] sm:%s290] %v299
                  %v301 = vld [vmem:[%s297 + $0x8] sm:%s290]
                  %302 = vst [vmem:[%s298 + $0x4] sm:%s290] %v301
                  %v303 = vld [vmem:[%s297 + $0x10] sm:%s290]
                  %304 = vst [vmem:[%s298 + $0x8] sm:%s290] %v303
                  %v305 = vld [vmem:[%s297 + $0x18] sm:%s290]
                  %306 = vst [vmem:[%s298 + $0xc] sm:%s290] %v305
                  %v307 = vld [vmem:[%s297 + $0x20] sm:%s290]
                  %308 = vst [vmem:[%s298 + $0x10] sm:%s290] %v307
                  %v309 = vld [vmem:[%s297 + $0x28] sm:%s290]
                  %310 = vst [vmem:[%s298 + $0x14] sm:%s290] %v309
                  %v311 = vld [vmem:[%s297 + $0x30] sm:%s290]
                  %312 = vst [vmem:[%s298 + $0x18] sm:%s290] %v311
                  %v313 = vld [vmem:[%s297 + $0x38] sm:%s290]
                  %314 = vst [vmem:[%s298 + $0x1c] sm:%s290] %v313
                  %v315 = vld [vmem:[%s297 + $0x40] sm:%s290]
                  %316 = vst [vmem:[%s298 + $0x20] sm:%s290] %v315
                  %v317 = vld [vmem:[%s297 + $0x48] sm:%s290]
                  %318 = vst [vmem:[%s298 + $0x24] sm:%s290] %v317
                  %v319 = vld [vmem:[%s297 + $0x50] sm:%s290]
                  %320 = vst [vmem:[%s298 + $0x28] sm:%s290] %v319
                  %v321 = vld [vmem:[%s297 + $0x58] sm:%s290]
                  %322 = vst [vmem:[%s298 + $0x2c] sm:%s290] %v321
                  %v323 = vld [vmem:[%s297 + $0x60] sm:%s290]
                  %324 = vst [vmem:[%s298 + $0x30] sm:%s290] %v323
                  %v325 = vld [vmem:[%s297 + $0x68] sm:%s290]
                  %326 = vst [vmem:[%s298 + $0x34] sm:%s290] %v325
                  %v327 = vld [vmem:[%s297 + $0x70] sm:%s290]
                  %328 = vst [vmem:[%s298 + $0x38] sm:%s290] %v327
                  %v329 = vld [vmem:[%s297 + $0x78] sm:%s290]
                  %330 = vst [vmem:[%s298 + $0x3c] sm:%s290] %v329
                $region71: #{fraud_gnn_forward.5} parent=58 // loop_footer
                  %s296 = sadd.s32 1, %s292
                $region72: #{fraud_gnn_forward.5} parent=58 // loop_footer_branch
                  %291 = sbr.rel target = $region68
                $region73: #{fraud_gnn_forward.5} parent=58 // loop_exit
                  _
              $region59: #{fraud_gnn_forward.5} parent=43 // pred_fallthru
                _
            $region44: #{fraud_gnn_forward.5} parent=39 // pred_fallthru
              _
            // Predicated region
            $region45: #{fraud_gnn_forward.5} parent=39 // pred_check
              _
            $region46: #{fraud_gnn_forward.5} parent=39 // pred_check_branch
              %236 = sbr.rel (0) target = $region48
            $region47: #{fraud_gnn_forward.5} parent=39 // pred_region
              %s238 = ssub.s32 16, 1
              loop: start=0, step=1, limit=1
              $region49: #{fraud_gnn_forward.5} parent=47 // loop_pre_header
                _
              $region50: #{fraud_gnn_forward.5} parent=47 // loop_header
                %s240 = sphi 0, %s244
                %p241 = scmp.ge.s32.totalorder %s240, 1
                %s245 = sphi %s230, %s230
                %s246 = sphi %s225, %s225
              $region51: #{fraud_gnn_forward.5} parent=47 // loop_header_branch
                %243 = sbr.rel (%p241) target = $region55
              $region52: #{fraud_gnn_forward.5} parent=47 // loop_body
                %v247 = vld [vmem:[%s245] sm:%s238]
                %248 = vst [vmem:[%s246] sm:%s238] %v247
                %v249 = vld [vmem:[%s245 + $0x8] sm:%s238]
                %250 = vst [vmem:[%s246 + $0x4] sm:%s238] %v249
                %v251 = vld [vmem:[%s245 + $0x10] sm:%s238]
                %252 = vst [vmem:[%s246 + $0x8] sm:%s238] %v251
                %v253 = vld [vmem:[%s245 + $0x18] sm:%s238]
                %254 = vst [vmem:[%s246 + $0xc] sm:%s238] %v253
                %v255 = vld [vmem:[%s245 + $0x20] sm:%s238]
                %256 = vst [vmem:[%s246 + $0x10] sm:%s238] %v255
                %v257 = vld [vmem:[%s245 + $0x28] sm:%s238]
                %258 = vst [vmem:[%s246 + $0x14] sm:%s238] %v257
                %v259 = vld [vmem:[%s245 + $0x30] sm:%s238]
                %260 = vst [vmem:[%s246 + $0x18] sm:%s238] %v259
                %v261 = vld [vmem:[%s245 + $0x38] sm:%s238]
                %262 = vst [vmem:[%s246 + $0x1c] sm:%s238] %v261
                %v263 = vld [vmem:[%s245 + $0x40] sm:%s238]
                %264 = vst [vmem:[%s246 + $0x20] sm:%s238] %v263
                %v265 = vld [vmem:[%s245 + $0x48] sm:%s238]
                %266 = vst [vmem:[%s246 + $0x24] sm:%s238] %v265
                %v267 = vld [vmem:[%s245 + $0x50] sm:%s238]
                %268 = vst [vmem:[%s246 + $0x28] sm:%s238] %v267
                %v269 = vld [vmem:[%s245 + $0x58] sm:%s238]
                %270 = vst [vmem:[%s246 + $0x2c] sm:%s238] %v269
                %v271 = vld [vmem:[%s245 + $0x60] sm:%s238]
                %272 = vst [vmem:[%s246 + $0x30] sm:%s238] %v271
                %v273 = vld [vmem:[%s245 + $0x68] sm:%s238]
                %274 = vst [vmem:[%s246 + $0x34] sm:%s238] %v273
                %v275 = vld [vmem:[%s245 + $0x70] sm:%s238]
                %276 = vst [vmem:[%s246 + $0x38] sm:%s238] %v275
                %v277 = vld [vmem:[%s245 + $0x78] sm:%s238]
                %278 = vst [vmem:[%s246 + $0x3c] sm:%s238] %v277
              $region53: #{fraud_gnn_forward.5} parent=47 // loop_footer
                %s244 = sadd.s32 1, %s240
              $region54: #{fraud_gnn_forward.5} parent=47 // loop_footer_branch
                %239 = sbr.rel target = $region50
              $region55: #{fraud_gnn_forward.5} parent=47 // loop_exit
                _
            $region48: #{fraud_gnn_forward.5} parent=39 // pred_fallthru
              _
          $region40: #{fraud_gnn_forward.5} parent=35 // pred_fallthru
            _
          %331 = vnop
        $region36: #{fraud_gnn_forward.5} parent=31 // pred_fallthru
          _
        // Predicated region
        $region74: #{fraud_gnn_forward.5} parent=31 // pred_check
          %p332 = pneg %p72
        $region75: #{fraud_gnn_forward.5} parent=31 // pred_check_branch
          %334 = sbr.rel (%p332) target = $region77
        $region76: #{fraud_gnn_forward.5} parent=31 // pred_region
          %s335 = smul.u32 16, %s20
          %p336 = scmp.lt.s32.totalorder %s335, 31
          %s337 = scalar_select %p336, %s335, 31
          %s338 = smul.addr %s337, 4
          %s339 = scalar_lea.vmem %s1, %s338
          %s340 = smul.u32 16, %s20
        $region77: #{fraud_gnn_forward.5} parent=31 // pred_fallthru
          _
      $region32: #{fraud_gnn_forward.5} parent=5 // pred_fallthru
        _
      %p341 = scmp.le.s32.totalorder 1, %s12
      %p342 = scmp.lt.s32.totalorder %s12, 5
      %p343 = pnand %p341, %p342
      %p344 = pneg %p343
      // Predicated region
      $region78: #{fraud_gnn_forward.5} parent=5 // pred_check
        _
      $region79: #{fraud_gnn_forward.5} parent=5 // pred_check_branch
        %346 = sbr.rel (%p343) target = $region81
      $region80: #{fraud_gnn_forward.5} parent=5 // pred_region
        %s347 = ssub.s32 %s12, 1
        %s348 = sand.u32 %s39, 1
        %s349 = sand.u32 %s39, 1
        %s350 = smul.addr %s349, 64
        %s351 = scalar_lea.vmem [#allocation3], %s350
        // Predicated region
        $region82: #{fraud_gnn_forward.5} parent=80 // pred_check
          %p352 = pneg %p52
        $region83: #{fraud_gnn_forward.5} parent=80 // pred_check_branch
          %354 = sbr.rel (%p352) target = $region85
        $region84: #{fraud_gnn_forward.5} parent=80 // pred_region
          _
        $region85: #{fraud_gnn_forward.5} parent=80 // pred_fallthru
          _
        %s355 = sand.u32 %s39, 1
        %s356 = sand.u32 %s39, 1
        %s357 = smul.addr %s356, 64
        %s358 = scalar_lea.vmem [#allocation3], %s357
        %p359 = pneg %p52
        %p360 = pneg %p49
        %s361 = smul.u32 16, %s22
        %p362 = scmp.lt.s32.totalorder %s361, 31
        %s363 = scalar_select %p362, %s361, 31
        %s364 = smul.addr %s363, 4
        %s365 = scalar_lea.vmem %s1, %s364
        %p366 = pneg %p78
        %p367 = pneg %p75
        %p368 = pneg %p99
        %p369 = pneg %p96
        %p370 = pneg %p120
        %p371 = pneg %p117
        %p372 = pneg %p141
        %p373 = pneg %p138
        %p374 = pneg %p162
        %p375 = pneg %p159
        %p376 = pneg %p188
        %p377 = pneg %p185
        %s378 = smul.u32 16, %s21
        %p379 = scmp.lt.s32.totalorder %s378, 31
        %s380 = scalar_select %p379, %s378, 31
        %s381 = smul.addr %s380, 8
        %s382 = scalar_lea.vmem %s6, %s381
        %s383 = smul.u32 16, %s21
        %s384 = smul.u32 16, %s22
        %p385 = scmp.lt.s32.totalorder %s384, 31
        %s386 = scalar_select %p385, %s384, 31
        %s387 = smul.addr %s386, 4
        %s388 = scalar_lea.vmem %s1, %s387
        %s389 = smul.u32 16, %s22
        %s390 = smul.u32 16, %s21
        %p391 = scmp.lt.s32.totalorder %s390, 31
        %s392 = scalar_select %p391, %s390, 31
        %s393 = smul.addr %s392, 8
        %s394 = scalar_lea.vmem %s6, %s393
        %s395 = smul.u32 16, %s21
        %p397 = scmp.eq.s32.totalorder %s22, 0
        // Predicated region
        $region86: #{fraud_gnn_forward.5} parent=80 // pred_check
          %p398 = pneg %p397
        $region87: #{fraud_gnn_forward.5} parent=80 // pred_check_branch
          %400 = sbr.rel (%p398) target = $region89
        $region88: #{fraud_gnn_forward.5} parent=80 // pred_region
          %401 = vst [vmem:[#allocation2] sm:$0xff] 0.0
          %402 = vst [vmem:[#allocation2 + $0x8] sm:$0xff] 0.0
          %403 = vst [vmem:[#allocation2 + $0x10] sm:$0xff] 0.0
          %404 = vst [vmem:[#allocation2 + $0x18] sm:$0xff] 0.0
          %405 = vst [vmem:[#allocation2 + $0x20] sm:$0xff] 0.0
          %406 = vst [vmem:[#allocation2 + $0x28] sm:$0xff] 0.0
          %407 = vst [vmem:[#allocation2 + $0x30] sm:$0xff] 0.0
          %408 = vst [vmem:[#allocation2 + $0x38] sm:$0xff] 0.0
          %409 = vst [vmem:[#allocation2 + $0x40] sm:$0xff] 0.0
          %410 = vst [vmem:[#allocation2 + $0x48] sm:$0xff] 0.0
          %411 = vst [vmem:[#allocation2 + $0x50] sm:$0xff] 0.0
          %412 = vst [vmem:[#allocation2 + $0x58] sm:$0xff] 0.0
          %413 = vst [vmem:[#allocation2 + $0x60] sm:$0xff] 0.0
          %414 = vst [vmem:[#allocation2 + $0x68] sm:$0xff] 0.0
          %415 = vst [vmem:[#allocation2 + $0x70] sm:$0xff] 0.0
          %416 = vst [vmem:[#allocation2 + $0x78] sm:$0xff] 0.0
        $region89: #{fraud_gnn_forward.5} parent=80 // pred_fallthru
          _
        %v417 = vld [vmem:[#allocation2] sm:$0xff]
        %v418 = vld [vmem:[#allocation2 + $0x8] sm:$0xff]
        %v419 = vld [vmem:[#allocation2 + $0x10] sm:$0xff]
        %v420 = vld [vmem:[#allocation2 + $0x18] sm:$0xff]
        %v421 = vld [vmem:[#allocation2 + $0x20] sm:$0xff]
        %v422 = vld [vmem:[#allocation2 + $0x28] sm:$0xff]
        %v423 = vld [vmem:[#allocation2 + $0x30] sm:$0xff]
        %v424 = vld [vmem:[#allocation2 + $0x38] sm:$0xff]
        %v425 = vld [vmem:[#allocation2 + $0x40] sm:$0xff]
        %v426 = vld [vmem:[#allocation2 + $0x48] sm:$0xff]
        %v427 = vld [vmem:[#allocation2 + $0x50] sm:$0xff]
        %v428 = vld [vmem:[#allocation2 + $0x58] sm:$0xff]
        %v429 = vld [vmem:[#allocation2 + $0x60] sm:$0xff]
        %v430 = vld [vmem:[#allocation2 + $0x68] sm:$0xff]
        %v431 = vld [vmem:[#allocation2 + $0x70] sm:$0xff]
        %v432 = vld [vmem:[#allocation2 + $0x78] sm:$0xff]
        %v433 = vld [vmem:[%s351] sm:$0xf]
        %v434 = vld [vmem:[%s351 + $0x4] sm:$0xf]
        %v435 = vld [vmem:[%s351 + $0x8] sm:$0xf]
        %v436 = vld [vmem:[%s351 + $0xc] sm:$0xf]
        %v437 = vld [vmem:[%s351 + $0x10] sm:$0xf]
        %v438 = vld [vmem:[%s351 + $0x14] sm:$0xf]
        %v439 = vld [vmem:[%s351 + $0x18] sm:$0xf]
        %v440 = vld [vmem:[%s351 + $0x1c] sm:$0xf]
        %v441 = vld [vmem:[%s351 + $0x20] sm:$0xf]
        %v442 = vld [vmem:[%s351 + $0x24] sm:$0xf]
        %v443 = vld [vmem:[%s351 + $0x28] sm:$0xf]
        %v444 = vld [vmem:[%s351 + $0x2c] sm:$0xf]
        %v445 = vld [vmem:[%s351 + $0x30] sm:$0xf]
        %v446 = vld [vmem:[%s351 + $0x34] sm:$0xf]
        %v447 = vld [vmem:[%s351 + $0x38] sm:$0xf]
        %v448 = vld [vmem:[%s351 + $0x3c] sm:$0xf]
        %v449 = vld [vmem:[%s388] sm:$0xf]
        %v450 = vld [vmem:[%s388 + $0x4] sm:$0xf]
        %v451 = vld [vmem:[%s388 + $0x8] sm:$0xf]
        %v452 = vld [vmem:[%s388 + $0xc] sm:$0xf]
        %v453 = vld [vmem:[%s388 + $0x10] sm:$0xf]
        %v454 = vld [vmem:[%s388 + $0x14] sm:$0xf]
        %v455 = vld [vmem:[%s388 + $0x18] sm:$0xf]
        %v456 = vld [vmem:[%s388 + $0x1c] sm:$0xf]
        %v457 = vld [vmem:[%s388 + $0x20] sm:$0xf]
        %v458 = vld [vmem:[%s388 + $0x24] sm:$0xf]
        %v459 = vld [vmem:[%s388 + $0x28] sm:$0xf]
        %v460 = vld [vmem:[%s388 + $0x2c] sm:$0xf]
        %v461 = vld [vmem:[%s388 + $0x30] sm:$0xf]
        %v462 = vld [vmem:[%s388 + $0x34] sm:$0xf]
        %v463 = vld [vmem:[%s388 + $0x38] sm:$0xf]
        %v464 = vld [vmem:[%s388 + $0x3c] sm:$0xf]
        %v481 = vunpack.c.l.b16 %v433
        %v482 = vunpack.c.l.b16 %v434
        %v483 = vunpack.c.l.b16 %v435
        %v484 = vunpack.c.l.b16 %v436
        %v485 = vunpack.c.l.b16 %v437
        %v486 = vunpack.c.l.b16 %v438
        %v487 = vunpack.c.l.b16 %v439
        %v488 = vunpack.c.l.b16 %v440
        %v489 = vunpack.c.l.b16 %v441
        %v490 = vunpack.c.l.b16 %v442
        %v491 = vunpack.c.l.b16 %v443
        %v492 = vunpack.c.l.b16 %v444
        %v493 = vunpack.c.l.b16 %v445
        %v494 = vunpack.c.l.b16 %v446
        %v495 = vunpack.c.l.b16 %v447
        %v496 = vunpack.c.l.b16 %v448
        %v497 = vpack.c.b16 %v482, %v481
        %v498 = vpack.c.b16 %v484, %v483
        %v499 = vpack.c.b16 %v486, %v485
        %v500 = vpack.c.b16 %v488, %v487
        %v501 = vpack.c.b16 %v490, %v489
        %v502 = vpack.c.b16 %v492, %v491
        %v503 = vpack.c.b16 %v494, %v493
        %v504 = vpack.c.b16 %v496, %v495
        %v529 = vunpack.c.l.b16 %v449
        %v530 = vunpack.c.l.b16 %v450
        %v531 = vunpack.c.l.b16 %v451
        %v532 = vunpack.c.l.b16 %v452
        %v533 = vunpack.c.l.b16 %v453
        %v534 = vunpack.c.l.b16 %v454
        %v535 = vunpack.c.l.b16 %v455
        %v536 = vunpack.c.l.b16 %v456
        %v537 = vunpack.c.l.b16 %v457
        %v538 = vunpack.c.l.b16 %v458
        %v539 = vunpack.c.l.b16 %v459
        %v540 = vunpack.c.l.b16 %v460
        %v541 = vunpack.c.l.b16 %v461
        %v542 = vunpack.c.l.b16 %v462
        %v543 = vunpack.c.l.b16 %v463
        %v544 = vunpack.c.l.b16 %v464
        %v545 = vpack.c.b16 %v530, %v529
        %v546 = vpack.c.b16 %v532, %v531
        %v547 = vpack.c.b16 %v534, %v533
        %v548 = vpack.c.b16 %v536, %v535
        %v549 = vpack.c.b16 %v538, %v537
        %v550 = vpack.c.b16 %v540, %v539
        %v551 = vpack.c.b16 %v542, %v541
        %v552 = vpack.c.b16 %v544, %v543
        %561 = vmatprep.subr.bf16.mxu0 0
        %562 = vmatpush1.bf16.msra.mxu0 %v552
        %563 = vmatprep.subr.bf16.mxu0 0
        %564 = vmatpush1.bf16.msra.mxu0 %v551
        %565 = vmatprep.subr.bf16.mxu0 0
        %566 = vmatpush1.bf16.msra.mxu0 %v550
        %567 = vmatprep.subr.bf16.mxu0 0
        %568 = vmatpush1.bf16.msra.mxu0 %v549
        %569 = vmatprep.subr.bf16.mxu0 0
        %570 = vmatpush1.bf16.msra.mxu0 %v548
        %571 = vmatprep.subr.bf16.mxu0 0
        %572 = vmatpush1.bf16.msra.mxu0 %v547
        %573 = vmatprep.subr.bf16.mxu0 0
        %574 = vmatpush1.bf16.msra.mxu0 %v546
        %575 = vmatprep.subr.bf16.mxu0 0
        %576 = vmatpush1.bf16.msra.mxu0 %v545
        %577 = vmatprep.subr.bf16.mxu0 0
        %578 = vmatpush2.bf16.msra.mxu0 0
        %579 = vmatprep.subr.bf16.mxu0 0
        %580 = vmatpush2.bf16.msra.mxu0 0
        %581 = vmatprep.subr.bf16.mxu0 0
        %582 = vmatpush2.bf16.msra.mxu0 0
        %583 = vmatprep.subr.bf16.mxu0 0
        %584 = vmatpush2.bf16.msra.mxu0 0
        %585 = vmatprep.subr.bf16.mxu0 0
        %586 = vmatpush2.bf16.msra.mxu0 0
        %587 = vmatprep.subr.bf16.mxu0 0
        %588 = vmatpush2.bf16.msra.mxu0 0
        %589 = vmatprep.subr.bf16.mxu0 0
        %590 = vmatpush2.bf16.msra.mxu0 0
        %591 = vmatprep.subr.bf16.mxu0 0
        %592 = vmatpush2.bf16.msra.mxu0 0
        %593 = vmatprep.mubr.bf16.mxu0 0
        %594 = vmatmul.mubr.bf16.gmra.mxu0 %v497
        %v595 = vpop.f32.mrf.mxu0
        %v596 = vadd.f32 0.0, %v595
        %v597 = vpop.f32.mrf.mxu0
        %v598 = vpop.f32.mrf.mxu0
        %v599 = vadd.f32 0.0, %v598
        %v600 = vpop.f32.mrf.mxu0
        %601 = vmatprep.mubr.bf16.mxu0 0
        %602 = vmatmul.mubr.bf16.gmra.mxu0 %v498
        %v603 = vpop.f32.mrf.mxu0
        %v604 = vadd.f32 0.0, %v603
        %v605 = vpop.f32.mrf.mxu0
        %v606 = vpop.f32.mrf.mxu0
        %v607 = vadd.f32 0.0, %v606
        %v608 = vpop.f32.mrf.mxu0
        %609 = vmatprep.mubr.bf16.mxu0 0
        %610 = vmatmul.mubr.bf16.gmra.mxu0 %v499
        %v611 = vpop.f32.mrf.mxu0
        %v612 = vadd.f32 0.0, %v611
        %v613 = vpop.f32.mrf.mxu0
        %v614 = vpop.f32.mrf.mxu0
        %v615 = vadd.f32 0.0, %v614
        %v616 = vpop.f32.mrf.mxu0
        %617 = vmatprep.mubr.bf16.mxu0 0
        %618 = vmatmul.mubr.bf16.gmra.mxu0 %v500
        %v619 = vpop.f32.mrf.mxu0
        %v620 = vadd.f32 0.0, %v619
        %v621 = vpop.f32.mrf.mxu0
        %v622 = vpop.f32.mrf.mxu0
        %v623 = vadd.f32 0.0, %v622
        %v624 = vpop.f32.mrf.mxu0
        %625 = vmatprep.mubr.bf16.mxu0 0
        %626 = vmatmul.mubr.bf16.gmra.mxu0 %v501
        %v627 = vpop.f32.mrf.mxu0
        %v628 = vadd.f32 0.0, %v627
        %v629 = vpop.f32.mrf.mxu0
        %v630 = vpop.f32.mrf.mxu0
        %v631 = vadd.f32 0.0, %v630
        %v632 = vpop.f32.mrf.mxu0
        %633 = vmatprep.mubr.bf16.mxu0 0
        %634 = vmatmul.mubr.bf16.gmra.mxu0 %v502
        %v635 = vpop.f32.mrf.mxu0
        %v636 = vadd.f32 0.0, %v635
        %v637 = vpop.f32.mrf.mxu0
        %v638 = vpop.f32.mrf.mxu0
        %v639 = vadd.f32 0.0, %v638
        %v640 = vpop.f32.mrf.mxu0
        %641 = vmatprep.mubr.bf16.mxu0 0
        %642 = vmatmul.mubr.bf16.gmra.mxu0 %v503
        %v643 = vpop.f32.mrf.mxu0
        %v644 = vadd.f32 0.0, %v643
        %v645 = vpop.f32.mrf.mxu0
        %v646 = vpop.f32.mrf.mxu0
        %v647 = vadd.f32 0.0, %v646
        %v648 = vpop.f32.mrf.mxu0
        %649 = vmatprep.mubr.bf16.mxu0 0
        %650 = vmatmul.mubr.bf16.gmra.mxu0 %v504
        %v651 = vpop.f32.mrf.mxu0
        %v652 = vadd.f32 0.0, %v651
        %v653 = vpop.f32.mrf.mxu0
        %v654 = vpop.f32.mrf.mxu0
        %v655 = vadd.f32 0.0, %v654
        %v656 = vpop.f32.mrf.mxu0
        %657 = vdwg.mxu0
        %v658 = vadd.f32 %v417, %v596
        %v659 = vadd.f32 %v418, %v599
        %v660 = vadd.f32 %v419, %v604
        %v661 = vadd.f32 %v420, %v607
        %v662 = vadd.f32 %v421, %v612
        %v663 = vadd.f32 %v422, %v615
        %v664 = vadd.f32 %v423, %v620
        %v665 = vadd.f32 %v424, %v623
        %v666 = vadd.f32 %v425, %v628
        %v667 = vadd.f32 %v426, %v631
        %v668 = vadd.f32 %v427, %v636
        %v669 = vadd.f32 %v428, %v639
        %v670 = vadd.f32 %v429, %v644
        %v671 = vadd.f32 %v430, %v647
        %v672 = vadd.f32 %v431, %v652
        %v673 = vadd.f32 %v432, %v655
        %674 = vst [vmem:[#allocation2] sm:$0xff] %v658
        %675 = vst [vmem:[#allocation2 + $0x8] sm:$0xff] %v659
        %676 = vst [vmem:[#allocation2 + $0x10] sm:$0xff] %v660
        %677 = vst [vmem:[#allocation2 + $0x18] sm:$0xff] %v661
        %678 = vst [vmem:[#allocation2 + $0x20] sm:$0xff] %v662
        %679 = vst [vmem:[#allocation2 + $0x28] sm:$0xff] %v663
        %680 = vst [vmem:[#allocation2 + $0x30] sm:$0xff] %v664
        %681 = vst [vmem:[#allocation2 + $0x38] sm:$0xff] %v665
        %682 = vst [vmem:[#allocation2 + $0x40] sm:$0xff] %v666
        %683 = vst [vmem:[#allocation2 + $0x48] sm:$0xff] %v667
        %684 = vst [vmem:[#allocation2 + $0x50] sm:$0xff] %v668
        %685 = vst [vmem:[#allocation2 + $0x58] sm:$0xff] %v669
        %686 = vst [vmem:[#allocation2 + $0x60] sm:$0xff] %v670
        %687 = vst [vmem:[#allocation2 + $0x68] sm:$0xff] %v671
        %688 = vst [vmem:[#allocation2 + $0x70] sm:$0xff] %v672
        %689 = vst [vmem:[#allocation2 + $0x78] sm:$0xff] %v673
        %p690 = scmp.eq.s32.totalorder %s22, 1
        // Predicated region
        $region90: #{fraud_gnn_forward.5} parent=80 // pred_check
          %p691 = pneg %p690
        $region91: #{fraud_gnn_forward.5} parent=80 // pred_check_branch
          %693 = sbr.rel (%p691) target = $region93
        $region92: #{fraud_gnn_forward.5} parent=80 // pred_region
          %v694 = vld [vmem:[#allocation2] sm:$0xff]
          %v695 = vld [vmem:[#allocation2 + $0x8] sm:$0xff]
          %v696 = vld [vmem:[#allocation2 + $0x10] sm:$0xff]
          %v697 = vld [vmem:[#allocation2 + $0x18] sm:$0xff]
          %v698 = vld [vmem:[#allocation2 + $0x20] sm:$0xff]
          %v699 = vld [vmem:[#allocation2 + $0x28] sm:$0xff]
          %v700 = vld [vmem:[#allocation2 + $0x30] sm:$0xff]
          %v701 = vld [vmem:[#allocation2 + $0x38] sm:$0xff]
          %v702 = vld [vmem:[#allocation2 + $0x40] sm:$0xff]
          %v703 = vld [vmem:[#allocation2 + $0x48] sm:$0xff]
          %v704 = vld [vmem:[#allocation2 + $0x50] sm:$0xff]
          %v705 = vld [vmem:[#allocation2 + $0x58] sm:$0xff]
          %v706 = vld [vmem:[#allocation2 + $0x60] sm:$0xff]
          %v707 = vld [vmem:[#allocation2 + $0x68] sm:$0xff]
          %v708 = vld [vmem:[#allocation2 + $0x70] sm:$0xff]
          %v709 = vld [vmem:[#allocation2 + $0x78] sm:$0xff]
          %v710 = vpack.c.bf16 %v695, %v694
          %v711 = vpack.c.bf16 %v697, %v696
          %v712 = vpack.c.bf16 %v699, %v698
          %v713 = vpack.c.bf16 %v701, %v700
          %v714 = vpack.c.bf16 %v703, %v702
          %v715 = vpack.c.bf16 %v705, %v704
          %v716 = vpack.c.bf16 %v707, %v706
          %v717 = vpack.c.bf16 %v709, %v708
          %v718 = vld [vmem:[%s2] sm:$0xf]
          %v719 = vld [vmem:[%s2 + $0x4] sm:$0xf]
          %v720 = vld [vmem:[%s2 + $0x8] sm:$0xf]
          %v721 = vld [vmem:[%s2 + $0xc] sm:$0xf]
          %v722 = vld [vmem:[%s2 + $0x10] sm:$0xf]
          %v723 = vld [vmem:[%s2 + $0x14] sm:$0xf]
          %v724 = vld [vmem:[%s2 + $0x18] sm:$0xf]
          %v725 = vld [vmem:[%s2 + $0x1c] sm:$0xf]
          %v726 = vld [vmem:[%s2 + $0x20] sm:$0xf]
          %v727 = vld [vmem:[%s2 + $0x24] sm:$0xf]
          %v728 = vld [vmem:[%s2 + $0x28] sm:$0xf]
          %v729 = vld [vmem:[%s2 + $0x2c] sm:$0xf]
          %v730 = vld [vmem:[%s2 + $0x30] sm:$0xf]
          %v731 = vld [vmem:[%s2 + $0x34] sm:$0xf]
          %v732 = vld [vmem:[%s2 + $0x38] sm:$0xf]
          %v733 = vld [vmem:[%s2 + $0x3c] sm:$0xf]
          %v734 = vld [vmem:[%s3] sm:$0x1]
          %v736 = vlaneseq
          %v737 = vshrl.u32 %v736, 7
          %v738 = vsub.s32 0, %v737
          %v739 = vrot.slane %v734, %v738
          %v757 = vunpack.c.l.b16 %v718
          %v758 = vunpack.c.l.b16 %v719
          %v759 = vunpack.c.l.b16 %v720
          %v760 = vunpack.c.l.b16 %v721
          %v761 = vunpack.c.l.b16 %v722
          %v762 = vunpack.c.l.b16 %v723
          %v763 = vunpack.c.l.b16 %v724
          %v764 = vunpack.c.l.b16 %v725
          %v765 = vunpack.c.l.b16 %v726
          %v766 = vunpack.c.l.b16 %v727
          %v767 = vunpack.c.l.b16 %v728
          %v768 = vunpack.c.l.b16 %v729
          %v769 = vunpack.c.l.b16 %v730
          %v770 = vunpack.c.l.b16 %v731
          %v771 = vunpack.c.l.b16 %v732
          %v772 = vunpack.c.l.b16 %v733
          %v773 = vpack.c.b16 %v758, %v757
          %v774 = vpack.c.b16 %v760, %v759
          %v775 = vpack.c.b16 %v762, %v761
          %v776 = vpack.c.b16 %v764, %v763
          %v777 = vpack.c.b16 %v766, %v765
          %v778 = vpack.c.b16 %v768, %v767
          %v779 = vpack.c.b16 %v770, %v769
          %v780 = vpack.c.b16 %v772, %v771
          %789 = vmatprep.subr.bf16.mxu0 0
          %790 = vmatpush1.bf16.msra.mxu0 %v780
          %791 = vmatprep.subr.bf16.mxu0 0
          %792 = vmatpush1.bf16.msra.mxu0 %v779
          %793 = vmatprep.subr.bf16.mxu0 0
          %794 = vmatpush1.bf16.msra.mxu0 %v778
          %795 = vmatprep.subr.bf16.mxu0 0
          %796 = vmatpush1.bf16.msra.mxu0 %v777
          %797 = vmatprep.subr.bf16.mxu0 0
          %798 = vmatpush1.bf16.msra.mxu0 %v776
          %799 = vmatprep.subr.bf16.mxu0 0
          %800 = vmatpush1.bf16.msra.mxu0 %v775
          %801 = vmatprep.subr.bf16.mxu0 0
          %802 = vmatpush1.bf16.msra.mxu0 %v774
          %803 = vmatprep.subr.bf16.mxu0 0
          %804 = vmatpush1.bf16.msra.mxu0 %v773
          %805 = vmatprep.subr.bf16.mxu0 0
          %806 = vmatpush2.bf16.msra.mxu0 0
          %807 = vmatprep.subr.bf16.mxu0 0
          %808 = vmatpush2.bf16.msra.mxu0 0
          %809 = vmatprep.subr.bf16.mxu0 0
          %810 = vmatpush2.bf16.msra.mxu0 0
          %811 = vmatprep.subr.bf16.mxu0 0
          %812 = vmatpush2.bf16.msra.mxu0 0
          %813 = vmatprep.subr.bf16.mxu0 0
          %814 = vmatpush2.bf16.msra.mxu0 0
          %815 = vmatprep.subr.bf16.mxu0 0
          %816 = vmatpush2.bf16.msra.mxu0 0
          %817 = vmatprep.subr.bf16.mxu0 0
          %818 = vmatpush2.bf16.msra.mxu0 0
          %819 = vmatprep.subr.bf16.mxu0 0
          %820 = vmatpush2.bf16.msra.mxu0 0
          %821 = vmatprep.mubr.bf16.mxu0 0
          %822 = vmatmul.mubr.bf16.gmra.mxu0 %v710
          %v823 = vpop.f32.mrf.mxu0
          %v824 = vadd.f32 %v739, %v823
          %v825 = vpop.f32.mrf.mxu0
          %v826 = vpop.f32.mrf.mxu0
          %v827 = vadd.f32 %v739, %v826
          %v828 = vpop.f32.mrf.mxu0
          %829 = vmatprep.mubr.bf16.mxu0 0
          %830 = vmatmul.mubr.bf16.gmra.mxu0 %v711
          %v831 = vpop.f32.mrf.mxu0
          %v832 = vadd.f32 %v739, %v831
          %v833 = vpop.f32.mrf.mxu0
          %v834 = vpop.f32.mrf.mxu0
          %v835 = vadd.f32 %v739, %v834
          %v836 = vpop.f32.mrf.mxu0
          %837 = vmatprep.mubr.bf16.mxu0 0
          %838 = vmatmul.mubr.bf16.gmra.mxu0 %v712
          %v839 = vpop.f32.mrf.mxu0
          %v840 = vadd.f32 %v739, %v839
          %v841 = vpop.f32.mrf.mxu0
          %v842 = vpop.f32.mrf.mxu0
          %v843 = vadd.f32 %v739, %v842
          %v844 = vpop.f32.mrf.mxu0
          %845 = vmatprep.mubr.bf16.mxu0 0
          %846 = vmatmul.mubr.bf16.gmra.mxu0 %v713
          %v847 = vpop.f32.mrf.mxu0
          %v848 = vadd.f32 %v739, %v847
          %v849 = vpop.f32.mrf.mxu0
          %v850 = vpop.f32.mrf.mxu0
          %v851 = vadd.f32 %v739, %v850
          %v852 = vpop.f32.mrf.mxu0
          %853 = vmatprep.mubr.bf16.mxu0 0
          %854 = vmatmul.mubr.bf16.gmra.mxu0 %v714
          %v855 = vpop.f32.mrf.mxu0
          %v856 = vadd.f32 %v739, %v855
          %v857 = vpop.f32.mrf.mxu0
          %v858 = vpop.f32.mrf.mxu0
          %v859 = vadd.f32 %v739, %v858
          %v860 = vpop.f32.mrf.mxu0
          %861 = vmatprep.mubr.bf16.mxu0 0
          %862 = vmatmul.mubr.bf16.gmra.mxu0 %v715
          %v863 = vpop.f32.mrf.mxu0
          %v864 = vadd.f32 %v739, %v863
          %v865 = vpop.f32.mrf.mxu0
          %v866 = vpop.f32.mrf.mxu0
          %v867 = vadd.f32 %v739, %v866
          %v868 = vpop.f32.mrf.mxu0
          %869 = vmatprep.mubr.bf16.mxu0 0
          %870 = vmatmul.mubr.bf16.gmra.mxu0 %v716
          %v871 = vpop.f32.mrf.mxu0
          %v872 = vadd.f32 %v739, %v871
          %v873 = vpop.f32.mrf.mxu0
          %v874 = vpop.f32.mrf.mxu0
          %v875 = vadd.f32 %v739, %v874
          %v876 = vpop.f32.mrf.mxu0
          %877 = vmatprep.mubr.bf16.mxu0 0
          %878 = vmatmul.mubr.bf16.gmra.mxu0 %v717
          %v879 = vpop.f32.mrf.mxu0
          %v880 = vadd.f32 %v739, %v879
          %v881 = vpop.f32.mrf.mxu0
          %v882 = vpop.f32.mrf.mxu0
          %v883 = vadd.f32 %v739, %v882
          %v884 = vpop.f32.mrf.mxu0
          %885 = vdwg.mxu0
          %886 = vst [vmem:[%s394] sm:$0xff] %v824
          %887 = vst [vmem:[%s394 + $0x8] sm:$0xff] %v827
          %888 = vst [vmem:[%s394 + $0x10] sm:$0xff] %v832
          %889 = vst [vmem:[%s394 + $0x18] sm:$0xff] %v835
          %890 = vst [vmem:[%s394 + $0x20] sm:$0xff] %v840
          %891 = vst [vmem:[%s394 + $0x28] sm:$0xff] %v843
          %892 = vst [vmem:[%s394 + $0x30] sm:$0xff] %v848
          %893 = vst [vmem:[%s394 + $0x38] sm:$0xff] %v851
          %894 = vst [vmem:[%s394 + $0x40] sm:$0xff] %v856
          %895 = vst [vmem:[%s394 + $0x48] sm:$0xff] %v859
          %896 = vst [vmem:[%s394 + $0x50] sm:$0xff] %v864
          %897 = vst [vmem:[%s394 + $0x58] sm:$0xff] %v867
          %898 = vst [vmem:[%s394 + $0x60] sm:$0xff] %v872
          %899 = vst [vmem:[%s394 + $0x68] sm:$0xff] %v875
          %900 = vst [vmem:[%s394 + $0x70] sm:$0xff] %v880
          %901 = vst [vmem:[%s394 + $0x78] sm:$0xff] %v883
        $region93: #{fraud_gnn_forward.5} parent=80 // pred_fallthru
          _
        %s902 = smul.u32 16, %s21
        %p903 = scmp.lt.s32.totalorder %s902, 31
        %s904 = scalar_select %p903, %s902, 31
        %s905 = smul.addr %s904, 8
        %s906 = scalar_lea.vmem %s6, %s905
        // Predicated region
        $region94: #{fraud_gnn_forward.5} parent=80 // pred_check
          %p907 = pneg %p185
        $region95: #{fraud_gnn_forward.5} parent=80 // pred_check_branch
          %909 = sbr.rel (%p907) target = $region97
        $region96: #{fraud_gnn_forward.5} parent=80 // pred_region
          %s910 = smul.u32 16, %s21
        $region97: #{fraud_gnn_forward.5} parent=80 // pred_fallthru
          _
      $region81: #{fraud_gnn_forward.5} parent=5 // pred_fallthru
        _
      %p911 = scmp.le.s32.totalorder 2, %s12
      // Predicated region
      $region98: #{fraud_gnn_forward.5} parent=5 // pred_check
        %p912 = pneg %p911
      $region99: #{fraud_gnn_forward.5} parent=5 // pred_check_branch
        %914 = sbr.rel (%p912) target = $region101
      $region100: #{fraud_gnn_forward.5} parent=5 // pred_region
        %s915 = ssub.s32 %s12, 2
        // Predicated region
        $region102: #{fraud_gnn_forward.5} parent=100 // pred_check
          %p916 = pneg %p191
        $region103: #{fraud_gnn_forward.5} parent=100 // pred_check_branch
          %918 = sbr.rel (%p916) target = $region105
        $region104: #{fraud_gnn_forward.5} parent=100 // pred_region
          %s919 = smul.u32 16, %s23
          %p920 = scmp.lt.s32.totalorder %s919, 31
          %s921 = scalar_select %p920, %s919, 31
          %s922 = smul.addr %s921, 8
          %s923 = scalar_lea.vmem %s6, %s922
        $region105: #{fraud_gnn_forward.5} parent=100 // pred_fallthru
          _
      $region101: #{fraud_gnn_forward.5} parent=5 // pred_fallthru
        _
    $region6: #{fraud_gnn_forward.5} parent=1 // loop_footer
      %s16 = sadd.s32 1, %s12
    $region7: #{fraud_gnn_forward.5} parent=1 // loop_footer_branch
      %11 = sbr.rel target = $region3
    $region8: #{fraud_gnn_forward.5} parent=1 // loop_exit
      _

// kernel: fraud_gnn_forward.3
$region0: #{fraud_gnn_forward.3}
  #allocation0 [shape = 'u32[]', space=smem, size = 0x4, offset = 0x4, fixed_abs, tag = 'smem constant byte address 0x4 - core index']
  #allocation1 [shape = 'u32[144,128]{1,0:T(1,128)}', space=vmem, size = 0x12000, scoped, tag = 'internal scratch']
  #allocation2 [shape = 'f32[128,128]{1,0:T(8,128)}', space=vmem, size = 0x10000, scoped, tag = 'scratch operand']
  %s0 = inlined_call_operand.vmem [shape: bf16[256,256], index: 0, kind: input, shape index: {}]
  %s1 = inlined_call_operand.vmem [shape: bf16[256,128], index: 1, kind: input, shape index: {}]
  %s2 = inlined_call_operand.vmem [shape: bf16[128,128], index: 2, kind: input, shape index: {}]
  %s3 = inlined_call_operand.vmem [shape: f32[1,128], index: 3, kind: input, shape index: {}]
  %s4 = inlined_call_operand.vmem [shape: f32[1,128], index: 4, kind: input, shape index: {}]
  %s5 = inlined_call_operand.vmem [shape: f32[1,128], index: 5, kind: input, shape index: {}]
  %s6 = inlined_call_operand.vmem [shape: bf16[256,128], index: 6, kind: output, shape index: {}]
  %s7 = sld [smem:[#allocation0]]
  $region106: #{fraud_gnn_forward.3} parent=0
    _
  %s9 = ssub.s32 1, %s7
  %s10 = scalar_select 0, %s9, %s7
  $region1: #{fraud_gnn_forward.3} parent=0
    #allocation3 [shape = 'u8[65536]{0}', space=vmem, size = 0x10000, scoped, tag = 'input window, operand 0']
    loop: start=0, step=1, limit=6
    $region2: #{fraud_gnn_forward.3} parent=1 // loop_pre_header
      _
    $region3: #{fraud_gnn_forward.3} parent=1 // loop_header
      %s12 = sphi 0, %s16
      %p13 = scmp.ge.s32.totalorder %s12, 6
      %s19 = sphi 0, %s31
      %s20 = sphi 0, %s27
      %s21 = sphi 0, %s19
      %s22 = sphi 0, %s20
      %s23 = sphi 0, %s21
      %s24 = sphi 0, %s22
      %s36 = sphi 0, %s38
      %s39 = sphi 0, %s36
      %s40 = sphi 0, %s39
      %s56 = sphi 0, %s40
      %s62 = sphi 0, %s64
      %s65 = sphi 0, %s62
      %s66 = sphi 0, %s65
      %s82 = sphi 0, %s66
      %s86 = sphi 0, %s86
      %s88 = sphi 0, %s86
      %s89 = sphi 0, %s88
      %s103 = sphi 0, %s89
      %s107 = sphi 0, %s107
      %s109 = sphi 0, %s107
      %s110 = sphi 0, %s109
      %s124 = sphi 0, %s110
      %s128 = sphi 0, %s128
      %s130 = sphi 0, %s128
      %s131 = sphi 0, %s130
      %s145 = sphi 0, %s131
      %s149 = sphi 0, %s149
      %s151 = sphi 0, %s149
      %s152 = sphi 0, %s151
      %s166 = sphi 0, %s152
      %s172 = sphi 0, %s174
      %s175 = sphi 0, %s172
      %s176 = sphi 0, %s175
      %s192 = sphi 0, %s176
    $region4: #{fraud_gnn_forward.3} parent=1 // loop_header_branch
      %15 = sbr.rel (%p13) target = $region8
    $region5: #{fraud_gnn_forward.3} parent=1 // loop_body
      %s17 = ssub.s32 %s12, 1
      %s18 = ssub.s32 %s12, 2
      %s25 = sadd.s32 1, %s20
      %p26 = scmp.ge.s32.totalorder %s25, 2
      %s27 = scalar_select %p26, 0, %s25
      %s28 = sadd.s32 1, %s19
      %s29 = scalar_select %p26, %s28, %s19
      %p30 = scmp.ge.s32.totalorder %s29, 2
      %s31 = scalar_select %p30, 0, %s29
      %s32 = ssub.s32 %s19, %s31
      %s33 = ssub.s32 %s20, %s27
      %s34 = sor.u32 %s32, %s33
      %p35 = scmp.eq.s32.totalorder %s34, 0
      %s37 = sadd.s32 %s36, 1
      %s38 = scalar_select %p35, %s36, %s37
      %p41 = pneg %p35
      %p42 = scmp.eq.s32.totalorder %s12, 3
      %p43 = por %p41, %p42
      %p44 = scmp.ne.s32.totalorder %s36, %s39
      %p45 = scmp.eq.s32.totalorder %s12, 0
      %p46 = por %p44, %p45
      %p47 = scmp.ne.s32.totalorder %s36, %s39
      %p48 = scmp.eq.s32.totalorder %s17, 3
      %p49 = por %p47, %p48
      %p50 = scmp.ne.s32.totalorder %s39, %s40
      %p51 = scmp.eq.s32.totalorder %s17, 0
      %p52 = por %p50, %p51
      %p53 = scmp.ne.s32.totalorder %s39, %s40
      %p54 = scmp.eq.s32.totalorder %s18, 3
      %p55 = por %p53, %p54
      %p57 = scmp.ne.s32.totalorder %s40, %s56
      %p58 = scmp.eq.s32.totalorder %s18, 0
      %p59 = por %p57, %p58
      %s60 = ssub.s32 %s20, %s27
      %p61 = scmp.eq.s32.totalorder %s60, 0
      %s63 = sadd.s32 %s62, 1
      %s64 = scalar_select %p61, %s62, %s63
      %p67 = pneg %p61
      %p68 = scmp.eq.s32.totalorder %s12, 3
      %p69 = por %p67, %p68
      %p70 = scmp.ne.s32.totalorder %s62, %s65
      %p71 = scmp.eq.s32.totalorder %s12, 0
      %p72 = por %p70, %p71
      %p73 = scmp.ne.s32.totalorder %s62, %s65
      %p74 = scmp.eq.s32.totalorder %s17, 3
      %p75 = por %p73, %p74
      %p76 = scmp.ne.s32.totalorder %s65, %s66
      %p77 = scmp.eq.s32.totalorder %s17, 0
      %p78 = por %p76, %p77
      %p79 = scmp.ne.s32.totalorder %s65, %s66
      %p80 = scmp.eq.s32.totalorder %s18, 3
      %p81 = por %p79, %p80
      %p83 = scmp.ne.s32.totalorder %s66, %s82
      %p84 = scmp.eq.s32.totalorder %s18, 0
      %p85 = por %p83, %p84
      %s87 = sadd.s32 %s86, 1
      %p90 = scmp.eq.s32.totalorder %s12, 3
      %p91 = scmp.ne.s32.totalorder %s86, %s88
      %p92 = scmp.eq.s32.totalorder %s12, 0
      %p93 = por %p91, %p92
      %p94 = scmp.ne.s32.totalorder %s86, %s88
      %p95 = scmp.eq.s32.totalorder %s17, 3
      %p96 = por %p94, %p95
      %p97 = scmp.ne.s32.totalorder %s88, %s89
      %p98 = scmp.eq.s32.totalorder %s17, 0
      %p99 = por %p97, %p98
      %p100 = scmp.ne.s32.totalorder %s88, %s89
      %p101 = scmp.eq.s32.totalorder %s18, 3
      %p102 = por %p100, %p101
      %p104 = scmp.ne.s32.totalorder %s89, %s103
      %p105 = scmp.eq.s32.totalorder %s18, 0
      %p106 = por %p104, %p105
      %s108 = sadd.s32 %s107, 1
      %p111 = scmp.eq.s32.totalorder %s12, 3
      %p112 = scmp.ne.s32.totalorder %s107, %s109
      %p113 = scmp.eq.s32.totalorder %s12, 0
      %p114 = por %p112, %p113
      %p115 = scmp.ne.s32.totalorder %s107, %s109
      %p116 = scmp.eq.s32.totalorder %s17, 3
      %p117 = por %p115, %p116
      %p118 = scmp.ne.s32.totalorder %s109, %s110
      %p119 = scmp.eq.s32.totalorder %s17, 0
      %p120 = por %p118, %p119
      %p121 = scmp.ne.s32.totalorder %s109, %s110
      %p122 = scmp.eq.s32.totalorder %s18, 3
      %p123 = por %p121, %p122
      %p125 = scmp.ne.s32.totalorder %s110, %s124
      %p126 = scmp.eq.s32.totalorder %s18, 0
      %p127 = por %p125, %p126
      %s129 = sadd.s32 %s128, 1
      %p132 = scmp.eq.s32.totalorder %s12, 3
      %p133 = scmp.ne.s32.totalorder %s128, %s130
      %p134 = scmp.eq.s32.totalorder %s12, 0
      %p135 = por %p133, %p134
      %p136 = scmp.ne.s32.totalorder %s128, %s130
      %p137 = scmp.eq.s32.totalorder %s17, 3
      %p138 = por %p136, %p137
      %p139 = scmp.ne.s32.totalorder %s130, %s131
      %p140 = scmp.eq.s32.totalorder %s17, 0
      %p141 = por %p139, %p140
      %p142 = scmp.ne.s32.totalorder %s130, %s131
      %p143 = scmp.eq.s32.totalorder %s18, 3
      %p144 = por %p142, %p143
      %p146 = scmp.ne.s32.totalorder %s131, %s145
      %p147 = scmp.eq.s32.totalorder %s18, 0
      %p148 = por %p146, %p147
      %s150 = sadd.s32 %s149, 1
      %p153 = scmp.eq.s32.totalorder %s12, 3
      %p154 = scmp.ne.s32.totalorder %s149, %s151
      %p155 = scmp.eq.s32.totalorder %s12, 0
      %p156 = por %p154, %p155
      %p157 = scmp.ne.s32.totalorder %s149, %s151
      %p158 = scmp.eq.s32.totalorder %s17, 3
      %p159 = por %p157, %p158
      %p160 = scmp.ne.s32.totalorder %s151, %s152
      %p161 = scmp.eq.s32.totalorder %s17, 0
      %p162 = por %p160, %p161
      %p163 = scmp.ne.s32.totalorder %s151, %s152
      %p164 = scmp.eq.s32.totalorder %s18, 3
      %p165 = por %p163, %p164
      %p167 = scmp.ne.s32.totalorder %s152, %s166
      %p168 = scmp.eq.s32.totalorder %s18, 0
      %p169 = por %p167, %p168
      %s170 = ssub.s32 %s19, %s31
      %p171 = scmp.eq.s32.totalorder %s170, 0
      %s173 = sadd.s32 %s172, 1
      %s174 = scalar_select %p171, %s172, %s173
      %p177 = pneg %p171
      %p178 = scmp.eq.s32.totalorder %s12, 3
      %p179 = por %p177, %p178
      %p180 = scmp.ne.s32.totalorder %s172, %s175
      %p181 = scmp.eq.s32.totalorder %s12, 0
      %p182 = por %p180, %p181
      %p183 = scmp.ne.s32.totalorder %s172, %s175
      %p184 = scmp.eq.s32.totalorder %s17, 3
      %p185 = por %p183, %p184
      %p186 = scmp.ne.s32.totalorder %s175, %s176
      %p187 = scmp.eq.s32.totalorder %s17, 0
      %p188 = por %p186, %p187
      %p189 = scmp.ne.s32.totalorder %s175, %s176
      %p190 = scmp.eq.s32.totalorder %s18, 3
      %p191 = por %p189, %p190
      %p193 = scmp.ne.s32.totalorder %s176, %s192
      %p194 = scmp.eq.s32.totalorder %s18, 0
      %p195 = por %p193, %p194
      %p196 = scmp.le.s32.totalorder 1, %s12
      %p197 = scmp.lt.s32.totalorder %s12, 5
      %p198 = pnand %p196, %p197
      %p199 = pneg %p198
      // Predicated region
      $region9: #{fraud_gnn_forward.3} parent=5 // pred_check
        _
      $region10: #{fraud_gnn_forward.3} parent=5 // pred_check_branch
        %201 = sbr.rel (%p198) target = $region12
      $region11: #{fraud_gnn_forward.3} parent=5 // pred_region
        %s202 = ssub.s32 %s12, 1
        // Predicated region
        $region13: #{fraud_gnn_forward.3} parent=11 // pred_check
          %p203 = pneg %p99
        $region14: #{fraud_gnn_forward.3} parent=11 // pred_check_branch
          %205 = sbr.rel (%p203) target = $region16
        $region15: #{fraud_gnn_forward.3} parent=11 // pred_region
          _
        $region16: #{fraud_gnn_forward.3} parent=11 // pred_fallthru
          _
        // Predicated region
        $region17: #{fraud_gnn_forward.3} parent=11 // pred_check
          %p206 = pneg %p120
        $region18: #{fraud_gnn_forward.3} parent=11 // pred_check_branch
          %208 = sbr.rel (%p206) target = $region20
        $region19: #{fraud_gnn_forward.3} parent=11 // pred_region
          _
        $region20: #{fraud_gnn_forward.3} parent=11 // pred_fallthru
          _
        // Predicated region
        $region21: #{fraud_gnn_forward.3} parent=11 // pred_check
          %p209 = pneg %p141
        $region22: #{fraud_gnn_forward.3} parent=11 // pred_check_branch
          %211 = sbr.rel (%p209) target = $region24
        $region23: #{fraud_gnn_forward.3} parent=11 // pred_region
          _
        $region24: #{fraud_gnn_forward.3} parent=11 // pred_fallthru
          _
        // Predicated region
        $region25: #{fraud_gnn_forward.3} parent=11 // pred_check
          %p212 = pneg %p162
        $region26: #{fraud_gnn_forward.3} parent=11 // pred_check_branch
          %214 = sbr.rel (%p212) target = $region28
        $region27: #{fraud_gnn_forward.3} parent=11 // pred_region
          _
        $region28: #{fraud_gnn_forward.3} parent=11 // pred_fallthru
          _
      $region12: #{fraud_gnn_forward.3} parent=5 // pred_fallthru
        _
      %p215 = scmp.lt.s32.totalorder %s12, 4
      // Predicated region
      $region29: #{fraud_gnn_forward.3} parent=5 // pred_check
        %p216 = pneg %p215
      $region30: #{fraud_gnn_forward.3} parent=5 // pred_check_branch
        %218 = sbr.rel (%p216) target = $region32
      $region31: #{fraud_gnn_forward.3} parent=5 // pred_region
        // Predicated region
        $region33: #{fraud_gnn_forward.3} parent=31 // pred_check
          %p219 = pneg %p46
        $region34: #{fraud_gnn_forward.3} parent=31 // pred_check_branch
          %221 = sbr.rel (%p219) target = $region36
        $region35: #{fraud_gnn_forward.3} parent=31 // pred_region
          %s222 = sand.u32 %s36, 1
          %s223 = sand.u32 %s36, 1
          %s224 = smul.addr %s223, 64
          %s225 = scalar_lea.vmem [#allocation3], %s224
          %s226 = smul.u32 16, %s19
          %s227 = smul.addr %s226, 2
          %s228 = sadd.s32 %s20, %s227
          %s229 = smul.addr %s228, 4
          %s230 = scalar_lea.vmem %s0, %s229
          // Predicated region
          $region37: #{fraud_gnn_forward.3} parent=35 // pred_check
            _
          $region38: #{fraud_gnn_forward.3} parent=35 // pred_check_branch
            %232 = sbr.rel (0) target = $region40
          $region39: #{fraud_gnn_forward.3} parent=35 // pred_region
            // Predicated region
            $region41: #{fraud_gnn_forward.3} parent=39 // pred_check
              _
            $region42: #{fraud_gnn_forward.3} parent=39 // pred_check_branch
              %234 = sbr.rel target = $region44
            $region43: #{fraud_gnn_forward.3} parent=39 // pred_region
              // Predicated region
              $region56: #{fraud_gnn_forward.3} parent=43 // pred_check
                _
              $region57: #{fraud_gnn_forward.3} parent=43 // pred_check_branch
                %280 = sbr.rel (0) target = $region59
              $region58: #{fraud_gnn_forward.3} parent=43 // pred_region
                loop: start=0, step=1, limit=1
                $region60: #{fraud_gnn_forward.3} parent=58 // loop_pre_header
                  _
                $region61: #{fraud_gnn_forward.3} parent=58 // loop_header
                  %s282 = sphi 0, %s286
                  %p283 = scmp.ge.s32.totalorder %s282, 1
                  %s287 = sphi %s230, %s230
                  %s288 = sphi %s225, %s225
                $region62: #{fraud_gnn_forward.3} parent=58 // loop_header_branch
                  %285 = sbr.rel (%p283) target = $region66
                $region63: #{fraud_gnn_forward.3} parent=58 // loop_body
                  _
                $region64: #{fraud_gnn_forward.3} parent=58 // loop_footer
                  %s286 = sadd.s32 1, %s282
                $region65: #{fraud_gnn_forward.3} parent=58 // loop_footer_branch
                  %281 = sbr.rel target = $region61
                $region66: #{fraud_gnn_forward.3} parent=58 // loop_exit
                  _
                %s290 = ssub.s32 16, 1
                loop: start=0, step=1, limit=1
                $region67: #{fraud_gnn_forward.3} parent=58 // loop_pre_header
                  _
                $region68: #{fraud_gnn_forward.3} parent=58 // loop_header
                  %s292 = sphi 0, %s296
                  %p293 = scmp.ge.s32.totalorder %s292, 1
                  %s297 = sphi %s230, %s230
                  %s298 = sphi %s225, %s225
                $region69: #{fraud_gnn_forward.3} parent=58 // loop_header_branch
                  %295 = sbr.rel (%p293) target = $region73
                $region70: #{fraud_gnn_forward.3} parent=58 // loop_body
                  %v299 = vld [vmem:[%s297] sm:%s290]
                  %300 = vst [vmem:[%s298] sm:%s290] %v299
                  %v301 = vld [vmem:[%s297 + $0x8] sm:%s290]
                  %302 = vst [vmem:[%s298 + $0x4] sm:%s290] %v301
                  %v303 = vld [vmem:[%s297 + $0x10] sm:%s290]
                  %304 = vst [vmem:[%s298 + $0x8] sm:%s290] %v303
                  %v305 = vld [vmem:[%s297 + $0x18] sm:%s290]
                  %306 = vst [vmem:[%s298 + $0xc] sm:%s290] %v305
                  %v307 = vld [vmem:[%s297 + $0x20] sm:%s290]
                  %308 = vst [vmem:[%s298 + $0x10] sm:%s290] %v307
                  %v309 = vld [vmem:[%s297 + $0x28] sm:%s290]
                  %310 = vst [vmem:[%s298 + $0x14] sm:%s290] %v309
                  %v311 = vld [vmem:[%s297 + $0x30] sm:%s290]
                  %312 = vst [vmem:[%s298 + $0x18] sm:%s290] %v311
                  %v313 = vld [vmem:[%s297 + $0x38] sm:%s290]
                  %314 = vst [vmem:[%s298 + $0x1c] sm:%s290] %v313
                  %v315 = vld [vmem:[%s297 + $0x40] sm:%s290]
                  %316 = vst [vmem:[%s298 + $0x20] sm:%s290] %v315
                  %v317 = vld [vmem:[%s297 + $0x48] sm:%s290]
                  %318 = vst [vmem:[%s298 + $0x24] sm:%s290] %v317
                  %v319 = vld [vmem:[%s297 + $0x50] sm:%s290]
                  %320 = vst [vmem:[%s298 + $0x28] sm:%s290] %v319
                  %v321 = vld [vmem:[%s297 + $0x58] sm:%s290]
                  %322 = vst [vmem:[%s298 + $0x2c] sm:%s290] %v321
                  %v323 = vld [vmem:[%s297 + $0x60] sm:%s290]
                  %324 = vst [vmem:[%s298 + $0x30] sm:%s290] %v323
                  %v325 = vld [vmem:[%s297 + $0x68] sm:%s290]
                  %326 = vst [vmem:[%s298 + $0x34] sm:%s290] %v325
                  %v327 = vld [vmem:[%s297 + $0x70] sm:%s290]
                  %328 = vst [vmem:[%s298 + $0x38] sm:%s290] %v327
                  %v329 = vld [vmem:[%s297 + $0x78] sm:%s290]
                  %330 = vst [vmem:[%s298 + $0x3c] sm:%s290] %v329
                $region71: #{fraud_gnn_forward.3} parent=58 // loop_footer
                  %s296 = sadd.s32 1, %s292
                $region72: #{fraud_gnn_forward.3} parent=58 // loop_footer_branch
                  %291 = sbr.rel target = $region68
                $region73: #{fraud_gnn_forward.3} parent=58 // loop_exit
                  _
              $region59: #{fraud_gnn_forward.3} parent=43 // pred_fallthru
                _
            $region44: #{fraud_gnn_forward.3} parent=39 // pred_fallthru
              _
            // Predicated region
            $region45: #{fraud_gnn_forward.3} parent=39 // pred_check
              _
            $region46: #{fraud_gnn_forward.3} parent=39 // pred_check_branch
              %236 = sbr.rel (0) target = $region48
            $region47: #{fraud_gnn_forward.3} parent=39 // pred_region
              %s238 = ssub.s32 16, 1
              loop: start=0, step=1, limit=1
              $region49: #{fraud_gnn_forward.3} parent=47 // loop_pre_header
                _
              $region50: #{fraud_gnn_forward.3} parent=47 // loop_header
                %s240 = sphi 0, %s244
                %p241 = scmp.ge.s32.totalorder %s240, 1
                %s245 = sphi %s230, %s230
                %s246 = sphi %s225, %s225
              $region51: #{fraud_gnn_forward.3} parent=47 // loop_header_branch
                %243 = sbr.rel (%p241) target = $region55
              $region52: #{fraud_gnn_forward.3} parent=47 // loop_body
                %v247 = vld [vmem:[%s245] sm:%s238]
                %248 = vst [vmem:[%s246] sm:%s238] %v247
                %v249 = vld [vmem:[%s245 + $0x8] sm:%s238]
                %250 = vst [vmem:[%s246 + $0x4] sm:%s238] %v249
                %v251 = vld [vmem:[%s245 + $0x10] sm:%s238]
                %252 = vst [vmem:[%s246 + $0x8] sm:%s238] %v251
                %v253 = vld [vmem:[%s245 + $0x18] sm:%s238]
                %254 = vst [vmem:[%s246 + $0xc] sm:%s238] %v253
                %v255 = vld [vmem:[%s245 + $0x20] sm:%s238]
                %256 = vst [vmem:[%s246 + $0x10] sm:%s238] %v255
                %v257 = vld [vmem:[%s245 + $0x28] sm:%s238]
                %258 = vst [vmem:[%s246 + $0x14] sm:%s238] %v257
                %v259 = vld [vmem:[%s245 + $0x30] sm:%s238]
                %260 = vst [vmem:[%s246 + $0x18] sm:%s238] %v259
                %v261 = vld [vmem:[%s245 + $0x38] sm:%s238]
                %262 = vst [vmem:[%s246 + $0x1c] sm:%s238] %v261
                %v263 = vld [vmem:[%s245 + $0x40] sm:%s238]
                %264 = vst [vmem:[%s246 + $0x20] sm:%s238] %v263
                %v265 = vld [vmem:[%s245 + $0x48] sm:%s238]
                %266 = vst [vmem:[%s246 + $0x24] sm:%s238] %v265
                %v267 = vld [vmem:[%s245 + $0x50] sm:%s238]
                %268 = vst [vmem:[%s246 + $0x28] sm:%s238] %v267
                %v269 = vld [vmem:[%s245 + $0x58] sm:%s238]
                %270 = vst [vmem:[%s246 + $0x2c] sm:%s238] %v269
                %v271 = vld [vmem:[%s245 + $0x60] sm:%s238]
                %272 = vst [vmem:[%s246 + $0x30] sm:%s238] %v271
                %v273 = vld [vmem:[%s245 + $0x68] sm:%s238]
                %274 = vst [vmem:[%s246 + $0x34] sm:%s238] %v273
                %v275 = vld [vmem:[%s245 + $0x70] sm:%s238]
                %276 = vst [vmem:[%s246 + $0x38] sm:%s238] %v275
                %v277 = vld [vmem:[%s245 + $0x78] sm:%s238]
                %278 = vst [vmem:[%s246 + $0x3c] sm:%s238] %v277
              $region53: #{fraud_gnn_forward.3} parent=47 // loop_footer
                %s244 = sadd.s32 1, %s240
              $region54: #{fraud_gnn_forward.3} parent=47 // loop_footer_branch
                %239 = sbr.rel target = $region50
              $region55: #{fraud_gnn_forward.3} parent=47 // loop_exit
                _
            $region48: #{fraud_gnn_forward.3} parent=39 // pred_fallthru
              _
          $region40: #{fraud_gnn_forward.3} parent=35 // pred_fallthru
            _
          %331 = vnop
        $region36: #{fraud_gnn_forward.3} parent=31 // pred_fallthru
          _
        // Predicated region
        $region74: #{fraud_gnn_forward.3} parent=31 // pred_check
          %p332 = pneg %p72
        $region75: #{fraud_gnn_forward.3} parent=31 // pred_check_branch
          %334 = sbr.rel (%p332) target = $region77
        $region76: #{fraud_gnn_forward.3} parent=31 // pred_region
          %s335 = smul.u32 16, %s20
          %p336 = scmp.lt.s32.totalorder %s335, 31
          %s337 = scalar_select %p336, %s335, 31
          %s338 = smul.addr %s337, 4
          %s339 = scalar_lea.vmem %s1, %s338
          %s340 = smul.u32 16, %s20
        $region77: #{fraud_gnn_forward.3} parent=31 // pred_fallthru
          _
      $region32: #{fraud_gnn_forward.3} parent=5 // pred_fallthru
        _
      %p341 = scmp.le.s32.totalorder 1, %s12
      %p342 = scmp.lt.s32.totalorder %s12, 5
      %p343 = pnand %p341, %p342
      %p344 = pneg %p343
      // Predicated region
      $region78: #{fraud_gnn_forward.3} parent=5 // pred_check
        _
      $region79: #{fraud_gnn_forward.3} parent=5 // pred_check_branch
        %346 = sbr.rel (%p343) target = $region81
      $region80: #{fraud_gnn_forward.3} parent=5 // pred_region
        %s347 = ssub.s32 %s12, 1
        %s348 = sand.u32 %s39, 1
        %s349 = sand.u32 %s39, 1
        %s350 = smul.addr %s349, 64
        %s351 = scalar_lea.vmem [#allocation3], %s350
        // Predicated region
        $region82: #{fraud_gnn_forward.3} parent=80 // pred_check
          %p352 = pneg %p52
        $region83: #{fraud_gnn_forward.3} parent=80 // pred_check_branch
          %354 = sbr.rel (%p352) target = $region85
        $region84: #{fraud_gnn_forward.3} parent=80 // pred_region
          _
        $region85: #{fraud_gnn_forward.3} parent=80 // pred_fallthru
          _
        %s355 = sand.u32 %s39, 1
        %s356 = sand.u32 %s39, 1
        %s357 = smul.addr %s356, 64
        %s358 = scalar_lea.vmem [#allocation3], %s357
        %p359 = pneg %p52
        %p360 = pneg %p49
        %s361 = smul.u32 16, %s22
        %p362 = scmp.lt.s32.totalorder %s361, 31
        %s363 = scalar_select %p362, %s361, 31
        %s364 = smul.addr %s363, 4
        %s365 = scalar_lea.vmem %s1, %s364
        %p366 = pneg %p78
        %p367 = pneg %p75
        %p368 = pneg %p99
        %p369 = pneg %p96
        %p370 = pneg %p120
        %p371 = pneg %p117
        %p372 = pneg %p141
        %p373 = pneg %p138
        %p374 = pneg %p162
        %p375 = pneg %p159
        %p376 = pneg %p188
        %p377 = pneg %p185
        %s378 = smul.u32 16, %s21
        %p379 = scmp.lt.s32.totalorder %s378, 31
        %s380 = scalar_select %p379, %s378, 31
        %s381 = smul.addr %s380, 4
        %s382 = scalar_lea.vmem %s6, %s381
        %s383 = smul.u32 16, %s21
        %s384 = smul.u32 16, %s22
        %p385 = scmp.lt.s32.totalorder %s384, 31
        %s386 = scalar_select %p385, %s384, 31
        %s387 = smul.addr %s386, 4
        %s388 = scalar_lea.vmem %s1, %s387
        %s389 = smul.u32 16, %s22
        %s390 = smul.u32 16, %s21
        %p391 = scmp.lt.s32.totalorder %s390, 31
        %s392 = scalar_select %p391, %s390, 31
        %s393 = smul.addr %s392, 4
        %s394 = scalar_lea.vmem %s6, %s393
        %s395 = smul.u32 16, %s21
        %p397 = scmp.eq.s32.totalorder %s22, 0
        // Predicated region
        $region86: #{fraud_gnn_forward.3} parent=80 // pred_check
          %p398 = pneg %p397
        $region87: #{fraud_gnn_forward.3} parent=80 // pred_check_branch
          %400 = sbr.rel (%p398) target = $region89
        $region88: #{fraud_gnn_forward.3} parent=80 // pred_region
          %401 = vst [vmem:[#allocation2] sm:$0xff] 0.0
          %402 = vst [vmem:[#allocation2 + $0x8] sm:$0xff] 0.0
          %403 = vst [vmem:[#allocation2 + $0x10] sm:$0xff] 0.0
          %404 = vst [vmem:[#allocation2 + $0x18] sm:$0xff] 0.0
          %405 = vst [vmem:[#allocation2 + $0x20] sm:$0xff] 0.0
          %406 = vst [vmem:[#allocation2 + $0x28] sm:$0xff] 0.0
          %407 = vst [vmem:[#allocation2 + $0x30] sm:$0xff] 0.0
          %408 = vst [vmem:[#allocation2 + $0x38] sm:$0xff] 0.0
          %409 = vst [vmem:[#allocation2 + $0x40] sm:$0xff] 0.0
          %410 = vst [vmem:[#allocation2 + $0x48] sm:$0xff] 0.0
          %411 = vst [vmem:[#allocation2 + $0x50] sm:$0xff] 0.0
          %412 = vst [vmem:[#allocation2 + $0x58] sm:$0xff] 0.0
          %413 = vst [vmem:[#allocation2 + $0x60] sm:$0xff] 0.0
          %414 = vst [vmem:[#allocation2 + $0x68] sm:$0xff] 0.0
          %415 = vst [vmem:[#allocation2 + $0x70] sm:$0xff] 0.0
          %416 = vst [vmem:[#allocation2 + $0x78] sm:$0xff] 0.0
        $region89: #{fraud_gnn_forward.3} parent=80 // pred_fallthru
          _
        %v417 = vld [vmem:[#allocation2] sm:$0xff]
        %v418 = vld [vmem:[#allocation2 + $0x8] sm:$0xff]
        %v419 = vld [vmem:[#allocation2 + $0x10] sm:$0xff]
        %v420 = vld [vmem:[#allocation2 + $0x18] sm:$0xff]
        %v421 = vld [vmem:[#allocation2 + $0x20] sm:$0xff]
        %v422 = vld [vmem:[#allocation2 + $0x28] sm:$0xff]
        %v423 = vld [vmem:[#allocation2 + $0x30] sm:$0xff]
        %v424 = vld [vmem:[#allocation2 + $0x38] sm:$0xff]
        %v425 = vld [vmem:[#allocation2 + $0x40] sm:$0xff]
        %v426 = vld [vmem:[#allocation2 + $0x48] sm:$0xff]
        %v427 = vld [vmem:[#allocation2 + $0x50] sm:$0xff]
        %v428 = vld [vmem:[#allocation2 + $0x58] sm:$0xff]
        %v429 = vld [vmem:[#allocation2 + $0x60] sm:$0xff]
        %v430 = vld [vmem:[#allocation2 + $0x68] sm:$0xff]
        %v431 = vld [vmem:[#allocation2 + $0x70] sm:$0xff]
        %v432 = vld [vmem:[#allocation2 + $0x78] sm:$0xff]
        %v433 = vld [vmem:[%s351] sm:$0xf]
        %v434 = vld [vmem:[%s351 + $0x4] sm:$0xf]
        %v435 = vld [vmem:[%s351 + $0x8] sm:$0xf]
        %v436 = vld [vmem:[%s351 + $0xc] sm:$0xf]
        %v437 = vld [vmem:[%s351 + $0x10] sm:$0xf]
        %v438 = vld [vmem:[%s351 + $0x14] sm:$0xf]
        %v439 = vld [vmem:[%s351 + $0x18] sm:$0xf]
        %v440 = vld [vmem:[%s351 + $0x1c] sm:$0xf]
        %v441 = vld [vmem:[%s351 + $0x20] sm:$0xf]
        %v442 = vld [vmem:[%s351 + $0x24] sm:$0xf]
        %v443 = vld [vmem:[%s351 + $0x28] sm:$0xf]
        %v444 = vld [vmem:[%s351 + $0x2c] sm:$0xf]
        %v445 = vld [vmem:[%s351 + $0x30] sm:$0xf]
        %v446 = vld [vmem:[%s351 + $0x34] sm:$0xf]
        %v447 = vld [vmem:[%s351 + $0x38] sm:$0xf]
        %v448 = vld [vmem:[%s351 + $0x3c] sm:$0xf]
        %v449 = vld [vmem:[%s388] sm:$0xf]
        %v450 = vld [vmem:[%s388 + $0x4] sm:$0xf]
        %v451 = vld [vmem:[%s388 + $0x8] sm:$0xf]
        %v452 = vld [vmem:[%s388 + $0xc] sm:$0xf]
        %v453 = vld [vmem:[%s388 + $0x10] sm:$0xf]
        %v454 = vld [vmem:[%s388 + $0x14] sm:$0xf]
        %v455 = vld [vmem:[%s388 + $0x18] sm:$0xf]
        %v456 = vld [vmem:[%s388 + $0x1c] sm:$0xf]
        %v457 = vld [vmem:[%s388 + $0x20] sm:$0xf]
        %v458 = vld [vmem:[%s388 + $0x24] sm:$0xf]
        %v459 = vld [vmem:[%s388 + $0x28] sm:$0xf]
        %v460 = vld [vmem:[%s388 + $0x2c] sm:$0xf]
        %v461 = vld [vmem:[%s388 + $0x30] sm:$0xf]
        %v462 = vld [vmem:[%s388 + $0x34] sm:$0xf]
        %v463 = vld [vmem:[%s388 + $0x38] sm:$0xf]
        %v464 = vld [vmem:[%s388 + $0x3c] sm:$0xf]
        %v481 = vunpack.c.l.b16 %v433
        %v482 = vunpack.c.l.b16 %v434
        %v483 = vunpack.c.l.b16 %v435
        %v484 = vunpack.c.l.b16 %v436
        %v485 = vunpack.c.l.b16 %v437
        %v486 = vunpack.c.l.b16 %v438
        %v487 = vunpack.c.l.b16 %v439
        %v488 = vunpack.c.l.b16 %v440
        %v489 = vunpack.c.l.b16 %v441
        %v490 = vunpack.c.l.b16 %v442
        %v491 = vunpack.c.l.b16 %v443
        %v492 = vunpack.c.l.b16 %v444
        %v493 = vunpack.c.l.b16 %v445
        %v494 = vunpack.c.l.b16 %v446
        %v495 = vunpack.c.l.b16 %v447
        %v496 = vunpack.c.l.b16 %v448
        %v497 = vpack.c.b16 %v482, %v481
        %v498 = vpack.c.b16 %v484, %v483
        %v499 = vpack.c.b16 %v486, %v485
        %v500 = vpack.c.b16 %v488, %v487
        %v501 = vpack.c.b16 %v490, %v489
        %v502 = vpack.c.b16 %v492, %v491
        %v503 = vpack.c.b16 %v494, %v493
        %v504 = vpack.c.b16 %v496, %v495
        %v529 = vunpack.c.l.b16 %v449
        %v530 = vunpack.c.l.b16 %v450
        %v531 = vunpack.c.l.b16 %v451
        %v532 = vunpack.c.l.b16 %v452
        %v533 = vunpack.c.l.b16 %v453
        %v534 = vunpack.c.l.b16 %v454
        %v535 = vunpack.c.l.b16 %v455
        %v536 = vunpack.c.l.b16 %v456
        %v537 = vunpack.c.l.b16 %v457
        %v538 = vunpack.c.l.b16 %v458
        %v539 = vunpack.c.l.b16 %v459
        %v540 = vunpack.c.l.b16 %v460
        %v541 = vunpack.c.l.b16 %v461
        %v542 = vunpack.c.l.b16 %v462
        %v543 = vunpack.c.l.b16 %v463
        %v544 = vunpack.c.l.b16 %v464
        %v545 = vpack.c.b16 %v530, %v529
        %v546 = vpack.c.b16 %v532, %v531
        %v547 = vpack.c.b16 %v534, %v533
        %v548 = vpack.c.b16 %v536, %v535
        %v549 = vpack.c.b16 %v538, %v537
        %v550 = vpack.c.b16 %v540, %v539
        %v551 = vpack.c.b16 %v542, %v541
        %v552 = vpack.c.b16 %v544, %v543
        %561 = vmatprep.subr.bf16.mxu0 0
        %562 = vmatpush1.bf16.msra.mxu0 %v552
        %563 = vmatprep.subr.bf16.mxu0 0
        %564 = vmatpush1.bf16.msra.mxu0 %v551
        %565 = vmatprep.subr.bf16.mxu0 0
        %566 = vmatpush1.bf16.msra.mxu0 %v550
        %567 = vmatprep.subr.bf16.mxu0 0
        %568 = vmatpush1.bf16.msra.mxu0 %v549
        %569 = vmatprep.subr.bf16.mxu0 0
        %570 = vmatpush1.bf16.msra.mxu0 %v548
        %571 = vmatprep.subr.bf16.mxu0 0
        %572 = vmatpush1.bf16.msra.mxu0 %v547
        %573 = vmatprep.subr.bf16.mxu0 0
        %574 = vmatpush1.bf16.msra.mxu0 %v546
        %575 = vmatprep.subr.bf16.mxu0 0
        %576 = vmatpush1.bf16.msra.mxu0 %v545
        %577 = vmatprep.subr.bf16.mxu0 0
        %578 = vmatpush2.bf16.msra.mxu0 0
        %579 = vmatprep.subr.bf16.mxu0 0
        %580 = vmatpush2.bf16.msra.mxu0 0
        %581 = vmatprep.subr.bf16.mxu0 0
        %582 = vmatpush2.bf16.msra.mxu0 0
        %583 = vmatprep.subr.bf16.mxu0 0
        %584 = vmatpush2.bf16.msra.mxu0 0
        %585 = vmatprep.subr.bf16.mxu0 0
        %586 = vmatpush2.bf16.msra.mxu0 0
        %587 = vmatprep.subr.bf16.mxu0 0
        %588 = vmatpush2.bf16.msra.mxu0 0
        %589 = vmatprep.subr.bf16.mxu0 0
        %590 = vmatpush2.bf16.msra.mxu0 0
        %591 = vmatprep.subr.bf16.mxu0 0
        %592 = vmatpush2.bf16.msra.mxu0 0
        %593 = vmatprep.mubr.bf16.mxu0 0
        %594 = vmatmul.mubr.bf16.gmra.mxu0 %v497
        %v595 = vpop.f32.mrf.mxu0
        %v596 = vadd.f32 0.0, %v595
        %v597 = vpop.f32.mrf.mxu0
        %v598 = vpop.f32.mrf.mxu0
        %v599 = vadd.f32 0.0, %v598
        %v600 = vpop.f32.mrf.mxu0
        %601 = vmatprep.mubr.bf16.mxu0 0
        %602 = vmatmul.mubr.bf16.gmra.mxu0 %v498
        %v603 = vpop.f32.mrf.mxu0
        %v604 = vadd.f32 0.0, %v603
        %v605 = vpop.f32.mrf.mxu0
        %v606 = vpop.f32.mrf.mxu0
        %v607 = vadd.f32 0.0, %v606
        %v608 = vpop.f32.mrf.mxu0
        %609 = vmatprep.mubr.bf16.mxu0 0
        %610 = vmatmul.mubr.bf16.gmra.mxu0 %v499
        %v611 = vpop.f32.mrf.mxu0
        %v612 = vadd.f32 0.0, %v611
        %v613 = vpop.f32.mrf.mxu0
        %v614 = vpop.f32.mrf.mxu0
        %v615 = vadd.f32 0.0, %v614
        %v616 = vpop.f32.mrf.mxu0
        %617 = vmatprep.mubr.bf16.mxu0 0
        %618 = vmatmul.mubr.bf16.gmra.mxu0 %v500
        %v619 = vpop.f32.mrf.mxu0
        %v620 = vadd.f32 0.0, %v619
        %v621 = vpop.f32.mrf.mxu0
        %v622 = vpop.f32.mrf.mxu0
        %v623 = vadd.f32 0.0, %v622
        %v624 = vpop.f32.mrf.mxu0
        %625 = vmatprep.mubr.bf16.mxu0 0
        %626 = vmatmul.mubr.bf16.gmra.mxu0 %v501
        %v627 = vpop.f32.mrf.mxu0
        %v628 = vadd.f32 0.0, %v627
        %v629 = vpop.f32.mrf.mxu0
        %v630 = vpop.f32.mrf.mxu0
        %v631 = vadd.f32 0.0, %v630
        %v632 = vpop.f32.mrf.mxu0
        %633 = vmatprep.mubr.bf16.mxu0 0
        %634 = vmatmul.mubr.bf16.gmra.mxu0 %v502
        %v635 = vpop.f32.mrf.mxu0
        %v636 = vadd.f32 0.0, %v635
        %v637 = vpop.f32.mrf.mxu0
        %v638 = vpop.f32.mrf.mxu0
        %v639 = vadd.f32 0.0, %v638
        %v640 = vpop.f32.mrf.mxu0
        %641 = vmatprep.mubr.bf16.mxu0 0
        %642 = vmatmul.mubr.bf16.gmra.mxu0 %v503
        %v643 = vpop.f32.mrf.mxu0
        %v644 = vadd.f32 0.0, %v643
        %v645 = vpop.f32.mrf.mxu0
        %v646 = vpop.f32.mrf.mxu0
        %v647 = vadd.f32 0.0, %v646
        %v648 = vpop.f32.mrf.mxu0
        %649 = vmatprep.mubr.bf16.mxu0 0
        %650 = vmatmul.mubr.bf16.gmra.mxu0 %v504
        %v651 = vpop.f32.mrf.mxu0
        %v652 = vadd.f32 0.0, %v651
        %v653 = vpop.f32.mrf.mxu0
        %v654 = vpop.f32.mrf.mxu0
        %v655 = vadd.f32 0.0, %v654
        %v656 = vpop.f32.mrf.mxu0
        %657 = vdwg.mxu0
        %v658 = vadd.f32 %v417, %v596
        %v659 = vadd.f32 %v418, %v599
        %v660 = vadd.f32 %v419, %v604
        %v661 = vadd.f32 %v420, %v607
        %v662 = vadd.f32 %v421, %v612
        %v663 = vadd.f32 %v422, %v615
        %v664 = vadd.f32 %v423, %v620
        %v665 = vadd.f32 %v424, %v623
        %v666 = vadd.f32 %v425, %v628
        %v667 = vadd.f32 %v426, %v631
        %v668 = vadd.f32 %v427, %v636
        %v669 = vadd.f32 %v428, %v639
        %v670 = vadd.f32 %v429, %v644
        %v671 = vadd.f32 %v430, %v647
        %v672 = vadd.f32 %v431, %v652
        %v673 = vadd.f32 %v432, %v655
        %674 = vst [vmem:[#allocation2] sm:$0xff] %v658
        %675 = vst [vmem:[#allocation2 + $0x8] sm:$0xff] %v659
        %676 = vst [vmem:[#allocation2 + $0x10] sm:$0xff] %v660
        %677 = vst [vmem:[#allocation2 + $0x18] sm:$0xff] %v661
        %678 = vst [vmem:[#allocation2 + $0x20] sm:$0xff] %v662
        %679 = vst [vmem:[#allocation2 + $0x28] sm:$0xff] %v663
        %680 = vst [vmem:[#allocation2 + $0x30] sm:$0xff] %v664
        %681 = vst [vmem:[#allocation2 + $0x38] sm:$0xff] %v665
        %682 = vst [vmem:[#allocation2 + $0x40] sm:$0xff] %v666
        %683 = vst [vmem:[#allocation2 + $0x48] sm:$0xff] %v667
        %684 = vst [vmem:[#allocation2 + $0x50] sm:$0xff] %v668
        %685 = vst [vmem:[#allocation2 + $0x58] sm:$0xff] %v669
        %686 = vst [vmem:[#allocation2 + $0x60] sm:$0xff] %v670
        %687 = vst [vmem:[#allocation2 + $0x68] sm:$0xff] %v671
        %688 = vst [vmem:[#allocation2 + $0x70] sm:$0xff] %v672
        %689 = vst [vmem:[#allocation2 + $0x78] sm:$0xff] %v673
        %p690 = scmp.eq.s32.totalorder %s22, 1
        // Predicated region
        $region90: #{fraud_gnn_forward.3} parent=80 // pred_check
          %p691 = pneg %p690
        $region91: #{fraud_gnn_forward.3} parent=80 // pred_check_branch
          %693 = sbr.rel (%p691) target = $region93
        $region92: #{fraud_gnn_forward.3} parent=80 // pred_region
          %v694 = vld [vmem:[#allocation2] sm:$0xff]
          %v695 = vld [vmem:[#allocation2 + $0x8] sm:$0xff]
          %v696 = vld [vmem:[#allocation2 + $0x10] sm:$0xff]
          %v697 = vld [vmem:[#allocation2 + $0x18] sm:$0xff]
          %v698 = vld [vmem:[#allocation2 + $0x20] sm:$0xff]
          %v699 = vld [vmem:[#allocation2 + $0x28] sm:$0xff]
          %v700 = vld [vmem:[#allocation2 + $0x30] sm:$0xff]
          %v701 = vld [vmem:[#allocation2 + $0x38] sm:$0xff]
          %v702 = vld [vmem:[#allocation2 + $0x40] sm:$0xff]
          %v703 = vld [vmem:[#allocation2 + $0x48] sm:$0xff]
          %v704 = vld [vmem:[#allocation2 + $0x50] sm:$0xff]
          %v705 = vld [vmem:[#allocation2 + $0x58] sm:$0xff]
          %v706 = vld [vmem:[#allocation2 + $0x60] sm:$0xff]
          %v707 = vld [vmem:[#allocation2 + $0x68] sm:$0xff]
          %v708 = vld [vmem:[#allocation2 + $0x70] sm:$0xff]
          %v709 = vld [vmem:[#allocation2 + $0x78] sm:$0xff]
          %v710 = vpack.c.bf16 %v695, %v694
          %v711 = vpack.c.bf16 %v697, %v696
          %v712 = vpack.c.bf16 %v699, %v698
          %v713 = vpack.c.bf16 %v701, %v700
          %v714 = vpack.c.bf16 %v703, %v702
          %v715 = vpack.c.bf16 %v705, %v704
          %v716 = vpack.c.bf16 %v707, %v706
          %v717 = vpack.c.bf16 %v709, %v708
          %v718 = vld [vmem:[%s2] sm:$0xf]
          %v719 = vld [vmem:[%s2 + $0x4] sm:$0xf]
          %v720 = vld [vmem:[%s2 + $0x8] sm:$0xf]
          %v721 = vld [vmem:[%s2 + $0xc] sm:$0xf]
          %v722 = vld [vmem:[%s2 + $0x10] sm:$0xf]
          %v723 = vld [vmem:[%s2 + $0x14] sm:$0xf]
          %v724 = vld [vmem:[%s2 + $0x18] sm:$0xf]
          %v725 = vld [vmem:[%s2 + $0x1c] sm:$0xf]
          %v726 = vld [vmem:[%s2 + $0x20] sm:$0xf]
          %v727 = vld [vmem:[%s2 + $0x24] sm:$0xf]
          %v728 = vld [vmem:[%s2 + $0x28] sm:$0xf]
          %v729 = vld [vmem:[%s2 + $0x2c] sm:$0xf]
          %v730 = vld [vmem:[%s2 + $0x30] sm:$0xf]
          %v731 = vld [vmem:[%s2 + $0x34] sm:$0xf]
          %v732 = vld [vmem:[%s2 + $0x38] sm:$0xf]
          %v733 = vld [vmem:[%s2 + $0x3c] sm:$0xf]
          %v734 = vld [vmem:[%s3] sm:$0x1]
          %v736 = vlaneseq
          %v737 = vshrl.u32 %v736, 7
          %v738 = vsub.s32 0, %v737
          %v739 = vrot.slane %v734, %v738
          %v757 = vunpack.c.l.b16 %v718
          %v758 = vunpack.c.l.b16 %v719
          %v759 = vunpack.c.l.b16 %v720
          %v760 = vunpack.c.l.b16 %v721
          %v761 = vunpack.c.l.b16 %v722
          %v762 = vunpack.c.l.b16 %v723
          %v763 = vunpack.c.l.b16 %v724
          %v764 = vunpack.c.l.b16 %v725
          %v765 = vunpack.c.l.b16 %v726
          %v766 = vunpack.c.l.b16 %v727
          %v767 = vunpack.c.l.b16 %v728
          %v768 = vunpack.c.l.b16 %v729
          %v769 = vunpack.c.l.b16 %v730
          %v770 = vunpack.c.l.b16 %v731
          %v771 = vunpack.c.l.b16 %v732
          %v772 = vunpack.c.l.b16 %v733
          %v773 = vpack.c.b16 %v758, %v757
          %v774 = vpack.c.b16 %v760, %v759
          %v775 = vpack.c.b16 %v762, %v761
          %v776 = vpack.c.b16 %v764, %v763
          %v777 = vpack.c.b16 %v766, %v765
          %v778 = vpack.c.b16 %v768, %v767
          %v779 = vpack.c.b16 %v770, %v769
          %v780 = vpack.c.b16 %v772, %v771
          %789 = vmatprep.subr.bf16.mxu0 0
          %790 = vmatpush1.bf16.msra.mxu0 %v780
          %791 = vmatprep.subr.bf16.mxu0 0
          %792 = vmatpush1.bf16.msra.mxu0 %v779
          %793 = vmatprep.subr.bf16.mxu0 0
          %794 = vmatpush1.bf16.msra.mxu0 %v778
          %795 = vmatprep.subr.bf16.mxu0 0
          %796 = vmatpush1.bf16.msra.mxu0 %v777
          %797 = vmatprep.subr.bf16.mxu0 0
          %798 = vmatpush1.bf16.msra.mxu0 %v776
          %799 = vmatprep.subr.bf16.mxu0 0
          %800 = vmatpush1.bf16.msra.mxu0 %v775
          %801 = vmatprep.subr.bf16.mxu0 0
          %802 = vmatpush1.bf16.msra.mxu0 %v774
          %803 = vmatprep.subr.bf16.mxu0 0
          %804 = vmatpush1.bf16.msra.mxu0 %v773
          %805 = vmatprep.subr.bf16.mxu0 0
          %806 = vmatpush2.bf16.msra.mxu0 0
          %807 = vmatprep.subr.bf16.mxu0 0
          %808 = vmatpush2.bf16.msra.mxu0 0
          %809 = vmatprep.subr.bf16.mxu0 0
          %810 = vmatpush2.bf16.msra.mxu0 0
          %811 = vmatprep.subr.bf16.mxu0 0
          %812 = vmatpush2.bf16.msra.mxu0 0
          %813 = vmatprep.subr.bf16.mxu0 0
          %814 = vmatpush2.bf16.msra.mxu0 0
          %815 = vmatprep.subr.bf16.mxu0 0
          %816 = vmatpush2.bf16.msra.mxu0 0
          %817 = vmatprep.subr.bf16.mxu0 0
          %818 = vmatpush2.bf16.msra.mxu0 0
          %819 = vmatprep.subr.bf16.mxu0 0
          %820 = vmatpush2.bf16.msra.mxu0 0
          %821 = vmatprep.mubr.bf16.mxu0 0
          %822 = vmatmul.mubr.bf16.gmra.mxu0 %v710
          %v823 = vpop.f32.mrf.mxu0
          %v824 = vadd.f32 %v739, %v823
          %v825 = vpop.f32.mrf.mxu0
          %v826 = vpop.f32.mrf.mxu0
          %v827 = vadd.f32 %v739, %v826
          %v828 = vpop.f32.mrf.mxu0
          %829 = vmatprep.mubr.bf16.mxu0 0
          %830 = vmatmul.mubr.bf16.gmra.mxu0 %v711
          %v831 = vpop.f32.mrf.mxu0
          %v832 = vadd.f32 %v739, %v831
          %v833 = vpop.f32.mrf.mxu0
          %v834 = vpop.f32.mrf.mxu0
          %v835 = vadd.f32 %v739, %v834
          %v836 = vpop.f32.mrf.mxu0
          %837 = vmatprep.mubr.bf16.mxu0 0
          %838 = vmatmul.mubr.bf16.gmra.mxu0 %v712
          %v839 = vpop.f32.mrf.mxu0
          %v840 = vadd.f32 %v739, %v839
          %v841 = vpop.f32.mrf.mxu0
          %v842 = vpop.f32.mrf.mxu0
          %v843 = vadd.f32 %v739, %v842
          %v844 = vpop.f32.mrf.mxu0
          %845 = vmatprep.mubr.bf16.mxu0 0
          %846 = vmatmul.mubr.bf16.gmra.mxu0 %v713
          %v847 = vpop.f32.mrf.mxu0
          %v848 = vadd.f32 %v739, %v847
          %v849 = vpop.f32.mrf.mxu0
          %v850 = vpop.f32.mrf.mxu0
          %v851 = vadd.f32 %v739, %v850
          %v852 = vpop.f32.mrf.mxu0
          %853 = vmatprep.mubr.bf16.mxu0 0
          %854 = vmatmul.mubr.bf16.gmra.mxu0 %v714
          %v855 = vpop.f32.mrf.mxu0
          %v856 = vadd.f32 %v739, %v855
          %v857 = vpop.f32.mrf.mxu0
          %v858 = vpop.f32.mrf.mxu0
          %v859 = vadd.f32 %v739, %v858
          %v860 = vpop.f32.mrf.mxu0
          %861 = vmatprep.mubr.bf16.mxu0 0
          %862 = vmatmul.mubr.bf16.gmra.mxu0 %v715
          %v863 = vpop.f32.mrf.mxu0
          %v864 = vadd.f32 %v739, %v863
          %v865 = vpop.f32.mrf.mxu0
          %v866 = vpop.f32.mrf.mxu0
          %v867 = vadd.f32 %v739, %v866
          %v868 = vpop.f32.mrf.mxu0
          %869 = vmatprep.mubr.bf16.mxu0 0
          %870 = vmatmul.mubr.bf16.gmra.mxu0 %v716
          %v871 = vpop.f32.mrf.mxu0
          %v872 = vadd.f32 %v739, %v871
          %v873 = vpop.f32.mrf.mxu0
          %v874 = vpop.f32.mrf.mxu0
          %v875 = vadd.f32 %v739, %v874
          %v876 = vpop.f32.mrf.mxu0
          %877 = vmatprep.mubr.bf16.mxu0 0
          %878 = vmatmul.mubr.bf16.gmra.mxu0 %v717
          %v879 = vpop.f32.mrf.mxu0
          %v880 = vadd.f32 %v739, %v879
          %v881 = vpop.f32.mrf.mxu0
          %v882 = vpop.f32.mrf.mxu0
          %v883 = vadd.f32 %v739, %v882
          %v884 = vpop.f32.mrf.mxu0
          %885 = vdwg.mxu0
          %v886 = vld [vmem:[%s4] sm:$0x1]
          %v887 = vld [vmem:[%s5] sm:$0x1]
          %888 = vadd.xlane.f32.xlu0 %v824
          %v889 = vpop.xlane.xlu0 %888
          %890 = vadd.xlane.f32.xlu0 %v827
          %v891 = vpop.xlane.xlu0 %890
          %892 = vadd.xlane.f32.xlu0 %v832
          %v893 = vpop.xlane.xlu0 %892
          %894 = vadd.xlane.f32.xlu0 %v835
          %v895 = vpop.xlane.xlu0 %894
          %896 = vadd.xlane.f32.xlu0 %v840
          %v897 = vpop.xlane.xlu0 %896
          %898 = vadd.xlane.f32.xlu0 %v843
          %v899 = vpop.xlane.xlu0 %898
          %900 = vadd.xlane.f32.xlu0 %v848
          %v901 = vpop.xlane.xlu0 %900
          %902 = vadd.xlane.f32.xlu0 %v851
          %v903 = vpop.xlane.xlu0 %902
          %904 = vadd.xlane.f32.xlu0 %v856
          %v905 = vpop.xlane.xlu0 %904
          %906 = vadd.xlane.f32.xlu0 %v859
          %v907 = vpop.xlane.xlu0 %906
          %908 = vadd.xlane.f32.xlu0 %v864
          %v909 = vpop.xlane.xlu0 %908
          %910 = vadd.xlane.f32.xlu0 %v867
          %v911 = vpop.xlane.xlu0 %910
          %912 = vadd.xlane.f32.xlu0 %v872
          %v913 = vpop.xlane.xlu0 %912
          %914 = vadd.xlane.f32.xlu0 %v875
          %v915 = vpop.xlane.xlu0 %914
          %916 = vadd.xlane.f32.xlu0 %v880
          %v917 = vpop.xlane.xlu0 %916
          %918 = vadd.xlane.f32.xlu0 %v883
          %v919 = vpop.xlane.xlu0 %918
          %v920 = vmul.f32 %v824, %v824
          %v921 = vmul.f32 %v827, %v827
          %v922 = vmul.f32 %v832, %v832
          %v923 = vmul.f32 %v835, %v835
          %v924 = vmul.f32 %v840, %v840
          %v925 = vmul.f32 %v843, %v843
          %v926 = vmul.f32 %v848, %v848
          %v927 = vmul.f32 %v851, %v851
          %v928 = vmul.f32 %v856, %v856
          %v929 = vmul.f32 %v859, %v859
          %v930 = vmul.f32 %v864, %v864
          %v931 = vmul.f32 %v867, %v867
          %v932 = vmul.f32 %v872, %v872
          %v933 = vmul.f32 %v875, %v875
          %v934 = vmul.f32 %v880, %v880
          %v935 = vmul.f32 %v883, %v883
          %936 = vadd.xlane.f32.xlu0 %v920
          %v937 = vpop.xlane.xlu0 %936
          %938 = vadd.xlane.f32.xlu0 %v921
          %v939 = vpop.xlane.xlu0 %938
          %940 = vadd.xlane.f32.xlu0 %v922
          %v941 = vpop.xlane.xlu0 %940
          %942 = vadd.xlane.f32.xlu0 %v923
          %v943 = vpop.xlane.xlu0 %942
          %944 = vadd.xlane.f32.xlu0 %v924
          %v945 = vpop.xlane.xlu0 %944
          %946 = vadd.xlane.f32.xlu0 %v925
          %v947 = vpop.xlane.xlu0 %946
          %948 = vadd.xlane.f32.xlu0 %v926
          %v949 = vpop.xlane.xlu0 %948
          %950 = vadd.xlane.f32.xlu0 %v927
          %v951 = vpop.xlane.xlu0 %950
          %952 = vadd.xlane.f32.xlu0 %v928
          %v953 = vpop.xlane.xlu0 %952
          %954 = vadd.xlane.f32.xlu0 %v929
          %v955 = vpop.xlane.xlu0 %954
          %956 = vadd.xlane.f32.xlu0 %v930
          %v957 = vpop.xlane.xlu0 %956
          %958 = vadd.xlane.f32.xlu0 %v931
          %v959 = vpop.xlane.xlu0 %958
          %960 = vadd.xlane.f32.xlu0 %v932
          %v961 = vpop.xlane.xlu0 %960
          %962 = vadd.xlane.f32.xlu0 %v933
          %v963 = vpop.xlane.xlu0 %962
          %964 = vadd.xlane.f32.xlu0 %v934
          %v965 = vpop.xlane.xlu0 %964
          %966 = vadd.xlane.f32.xlu0 %v935
          %v967 = vpop.xlane.xlu0 %966
          %v968 = vrcp.pop 32.0
          %v969 = vmul.f32 %v889, %v968
          %v970 = vmul.f32 %v891, %v968
          %v971 = vmul.f32 %v893, %v968
          %v972 = vmul.f32 %v895, %v968
          %v973 = vmul.f32 %v897, %v968
          %v974 = vmul.f32 %v899, %v968
          %v975 = vmul.f32 %v901, %v968
          %v976 = vmul.f32 %v903, %v968
          %v977 = vmul.f32 %v905, %v968
          %v978 = vmul.f32 %v907, %v968
          %v979 = vmul.f32 %v909, %v968
          %v980 = vmul.f32 %v911, %v968
          %v981 = vmul.f32 %v913, %v968
          %v982 = vmul.f32 %v915, %v968
          %v983 = vmul.f32 %v917, %v968
          %v984 = vmul.f32 %v919, %v968
          %v985 = vmul.f32 %v937, %v968
          %v986 = vmul.f32 %v939, %v968
          %v987 = vmul.f32 %v941, %v968
          %v988 = vmul.f32 %v943, %v968
          %v989 = vmul.f32 %v945, %v968
          %v990 = vmul.f32 %v947, %v968
          %v991 = vmul.f32 %v949, %v968
          %v992 = vmul.f32 %v951, %v968
          %v993 = vmul.f32 %v953, %v968
          %v994 = vmul.f32 %v955, %v968
          %v995 = vmul.f32 %v957, %v968
          %v996 = vmul.f32 %v959, %v968
          %v997 = vmul.f32 %v961, %v968
          %v998 = vmul.f32 %v963, %v968
          %v999 = vmul.f32 %v965, %v968
          %v1000 = vmul.f32 %v967, %v968
          %v1001 = vmul.f32 %v969, %v969
          %v1002 = vmul.f32 %v970, %v970
          %v1003 = vmul.f32 %v971, %v971
          %v1004 = vmul.f32 %v972, %v972
          %v1005 = vmul.f32 %v973, %v973
          %v1006 = vmul.f32 %v974, %v974
          %v1007 = vmul.f32 %v975, %v975
          %v1008 = vmul.f32 %v976, %v976
          %v1009 = vmul.f32 %v977, %v977
          %v1010 = vmul.f32 %v978, %v978
          %v1011 = vmul.f32 %v979, %v979
          %v1012 = vmul.f32 %v980, %v980
          %v1013 = vmul.f32 %v981, %v981
          %v1014 = vmul.f32 %v982, %v982
          %v1015 = vmul.f32 %v983, %v983
          %v1016 = vmul.f32 %v984, %v984
          %v1017 = vsub.f32 %v985, %v1001
          %v1018 = vsub.f32 %v986, %v1002
          %v1019 = vsub.f32 %v987, %v1003
          %v1020 = vsub.f32 %v988, %v1004
          %v1021 = vsub.f32 %v989, %v1005
          %v1022 = vsub.f32 %v990, %v1006
          %v1023 = vsub.f32 %v991, %v1007
          %v1024 = vsub.f32 %v992, %v1008
          %v1025 = vsub.f32 %v993, %v1009
          %v1026 = vsub.f32 %v994, %v1010
          %v1027 = vsub.f32 %v995, %v1011
          %v1028 = vsub.f32 %v996, %v1012
          %v1029 = vsub.f32 %v997, %v1013
          %v1030 = vsub.f32 %v998, %v1014
          %v1031 = vsub.f32 %v999, %v1015
          %v1032 = vsub.f32 %v1000, %v1016
          %v1033 = vsub.f32 %v824, %v969
          %v1034 = vsub.f32 %v827, %v970
          %v1035 = vsub.f32 %v832, %v971
          %v1036 = vsub.f32 %v835, %v972
          %v1037 = vsub.f32 %v840, %v973
          %v1038 = vsub.f32 %v843, %v974
          %v1039 = vsub.f32 %v848, %v975
          %v1040 = vsub.f32 %v851, %v976
          %v1041 = vsub.f32 %v856, %v977
          %v1042 = vsub.f32 %v859, %v978
          %v1043 = vsub.f32 %v864, %v979
          %v1044 = vsub.f32 %v867, %v980
          %v1045 = vsub.f32 %v872, %v981
          %v1046 = vsub.f32 %v875, %v982
          %v1047 = vsub.f32 %v880, %v983
          %v1048 = vsub.f32 %v883, %v984
          %v1049 = vadd.f32 %v1017, 1e-05
          %v1050 = vadd.f32 %v1018, 1e-05
          %v1051 = vadd.f32 %v1019, 1e-05
          %v1052 = vadd.f32 %v1020, 1e-05
          %v1053 = vadd.f32 %v1021, 1e-05
          %v1054 = vadd.f32 %v1022, 1e-05
          %v1055 = vadd.f32 %v1023, 1e-05
          %v1056 = vadd.f32 %v1024, 1e-05
          %v1057 = vadd.f32 %v1025, 1e-05
          %v1058 = vadd.f32 %v1026, 1e-05
          %v1059 = vadd.f32 %v1027, 1e-05
          %v1060 = vadd.f32 %v1028, 1e-05
          %v1061 = vadd.f32 %v1029, 1e-05
          %v1062 = vadd.f32 %v1030, 1e-05
          %v1063 = vadd.f32 %v1031, 1e-05
          %v1064 = vadd.f32 %v1032, 1e-05
          %v1065 = vrsqrt.pop %v1049
          %v1066 = vrsqrt.pop %v1050
          %v1067 = vrsqrt.pop %v1051
          %v1068 = vrsqrt.pop %v1052
          %v1069 = vrsqrt.pop %v1053
          %v1070 = vrsqrt.pop %v1054
          %v1071 = vrsqrt.pop %v1055
          %v1072 = vrsqrt.pop %v1056
          %v1073 = vrsqrt.pop %v1057
          %v1074 = vrsqrt.pop %v1058
          %v1075 = vrsqrt.pop %v1059
          %v1076 = vrsqrt.pop %v1060
          %v1077 = vrsqrt.pop %v1061
          %v1078 = vrsqrt.pop %v1062
          %v1079 = vrsqrt.pop %v1063
          %v1080 = vrsqrt.pop %v1064
          %v1081 = vmul.f32 %v1033, %v1065
          %v1082 = vmul.f32 %v1034, %v1066
          %v1083 = vmul.f32 %v1035, %v1067
          %v1084 = vmul.f32 %v1036, %v1068
          %v1085 = vmul.f32 %v1037, %v1069
          %v1086 = vmul.f32 %v1038, %v1070
          %v1087 = vmul.f32 %v1039, %v1071
          %v1088 = vmul.f32 %v1040, %v1072
          %v1089 = vmul.f32 %v1041, %v1073
          %v1090 = vmul.f32 %v1042, %v1074
          %v1091 = vmul.f32 %v1043, %v1075
          %v1092 = vmul.f32 %v1044, %v1076
          %v1093 = vmul.f32 %v1045, %v1077
          %v1094 = vmul.f32 %v1046, %v1078
          %v1095 = vmul.f32 %v1047, %v1079
          %v1096 = vmul.f32 %v1048, %v1080
          %v1098 = vlaneseq
          %v1099 = vshrl.u32 %v1098, 7
          %v1100 = vsub.s32 0, %v1099
          %v1101 = vrot.slane %v886, %v1100
          %v1103 = vmul.f32 %v1081, %v1101
          %v1104 = vmul.f32 %v1082, %v1101
          %v1105 = vmul.f32 %v1083, %v1101
          %v1106 = vmul.f32 %v1084, %v1101
          %v1107 = vmul.f32 %v1085, %v1101
          %v1108 = vmul.f32 %v1086, %v1101
          %v1109 = vmul.f32 %v1087, %v1101
          %v1110 = vmul.f32 %v1088, %v1101
          %v1111 = vmul.f32 %v1089, %v1101
          %v1112 = vmul.f32 %v1090, %v1101
          %v1113 = vmul.f32 %v1091, %v1101
          %v1114 = vmul.f32 %v1092, %v1101
          %v1115 = vmul.f32 %v1093, %v1101
          %v1116 = vmul.f32 %v1094, %v1101
          %v1117 = vmul.f32 %v1095, %v1101
          %v1118 = vmul.f32 %v1096, %v1101
          %v1120 = vlaneseq
          %v1121 = vshrl.u32 %v1120, 7
          %v1122 = vsub.s32 0, %v1121
          %v1123 = vrot.slane %v887, %v1122
          %v1125 = vadd.f32 %v1103, %v1123
          %v1126 = vadd.f32 %v1104, %v1123
          %v1127 = vadd.f32 %v1105, %v1123
          %v1128 = vadd.f32 %v1106, %v1123
          %v1129 = vadd.f32 %v1107, %v1123
          %v1130 = vadd.f32 %v1108, %v1123
          %v1131 = vadd.f32 %v1109, %v1123
          %v1132 = vadd.f32 %v1110, %v1123
          %v1133 = vadd.f32 %v1111, %v1123
          %v1134 = vadd.f32 %v1112, %v1123
          %v1135 = vadd.f32 %v1113, %v1123
          %v1136 = vadd.f32 %v1114, %v1123
          %v1137 = vadd.f32 %v1115, %v1123
          %v1138 = vadd.f32 %v1116, %v1123
          %v1139 = vadd.f32 %v1117, %v1123
          %v1140 = vadd.f32 %v1118, %v1123
          %vm1141 = vcmp.ge.f32.partialorder %v1125, 0.0
          %vm1142 = vcmp.ge.f32.partialorder %v1126, 0.0
          %vm1143 = vcmp.ge.f32.partialorder %v1127, 0.0
          %vm1144 = vcmp.ge.f32.partialorder %v1128, 0.0
          %vm1145 = vcmp.ge.f32.partialorder %v1129, 0.0
          %vm1146 = vcmp.ge.f32.partialorder %v1130, 0.0
          %vm1147 = vcmp.ge.f32.partialorder %v1131, 0.0
          %vm1148 = vcmp.ge.f32.partialorder %v1132, 0.0
          %vm1149 = vcmp.ge.f32.partialorder %v1133, 0.0
          %vm1150 = vcmp.ge.f32.partialorder %v1134, 0.0
          %vm1151 = vcmp.ge.f32.partialorder %v1135, 0.0
          %vm1152 = vcmp.ge.f32.partialorder %v1136, 0.0
          %vm1153 = vcmp.ge.f32.partialorder %v1137, 0.0
          %vm1154 = vcmp.ge.f32.partialorder %v1138, 0.0
          %vm1155 = vcmp.ge.f32.partialorder %v1139, 0.0
          %vm1156 = vcmp.ge.f32.partialorder %v1140, 0.0
          %v1157 = vmul.f32 %v1125, 0.01
          %v1158 = vmul.f32 %v1126, 0.01
          %v1159 = vmul.f32 %v1127, 0.01
          %v1160 = vmul.f32 %v1128, 0.01
          %v1161 = vmul.f32 %v1129, 0.01
          %v1162 = vmul.f32 %v1130, 0.01
          %v1163 = vmul.f32 %v1131, 0.01
          %v1164 = vmul.f32 %v1132, 0.01
          %v1165 = vmul.f32 %v1133, 0.01
          %v1166 = vmul.f32 %v1134, 0.01
          %v1167 = vmul.f32 %v1135, 0.01
          %v1168 = vmul.f32 %v1136, 0.01
          %v1169 = vmul.f32 %v1137, 0.01
          %v1170 = vmul.f32 %v1138, 0.01
          %v1171 = vmul.f32 %v1139, 0.01
          %v1172 = vmul.f32 %v1140, 0.01
          %v1173 = vsel %vm1141, %v1125, %v1157
          %v1174 = vsel %vm1142, %v1126, %v1158
          %v1175 = vsel %vm1143, %v1127, %v1159
          %v1176 = vsel %vm1144, %v1128, %v1160
          %v1177 = vsel %vm1145, %v1129, %v1161
          %v1178 = vsel %vm1146, %v1130, %v1162
          %v1179 = vsel %vm1147, %v1131, %v1163
          %v1180 = vsel %vm1148, %v1132, %v1164
          %v1181 = vsel %vm1149, %v1133, %v1165
          %v1182 = vsel %vm1150, %v1134, %v1166
          %v1183 = vsel %vm1151, %v1135, %v1167
          %v1184 = vsel %vm1152, %v1136, %v1168
          %v1185 = vsel %vm1153, %v1137, %v1169
          %v1186 = vsel %vm1154, %v1138, %v1170
          %v1187 = vsel %vm1155, %v1139, %v1171
          %v1188 = vsel %vm1156, %v1140, %v1172
          %v1189 = vpack.c.bf16 %v1174, %v1173
          %v1190 = vpack.c.bf16 %v1176, %v1175
          %v1191 = vpack.c.bf16 %v1178, %v1177
          %v1192 = vpack.c.bf16 %v1180, %v1179
          %v1193 = vpack.c.bf16 %v1182, %v1181
          %v1194 = vpack.c.bf16 %v1184, %v1183
          %v1195 = vpack.c.bf16 %v1186, %v1185
          %v1196 = vpack.c.bf16 %v1188, %v1187
          %v1205 = vunpack.c.l.b16 %v1189
          %v1206 = vunpack.c.h.b16 %v1189
          %v1207 = vunpack.c.l.b16 %v1190
          %v1208 = vunpack.c.h.b16 %v1190
          %v1209 = vunpack.c.l.b16 %v1191
          %v1210 = vunpack.c.h.b16 %v1191
          %v1211 = vunpack.c.l.b16 %v1192
          %v1212 = vunpack.c.h.b16 %v1192
          %v1213 = vunpack.c.l.b16 %v1193
          %v1214 = vunpack.c.h.b16 %v1193
          %v1215 = vunpack.c.l.b16 %v1194
          %v1216 = vunpack.c.h.b16 %v1194
          %v1217 = vunpack.c.l.b16 %v1195
          %v1218 = vunpack.c.h.b16 %v1195
          %v1219 = vunpack.c.l.b16 %v1196
          %v1220 = vunpack.c.h.b16 %v1196
          %v1221 = vpack.c.b16 %v1205, %v1205
          %v1222 = vpack.c.b16 %v1206, %v1206
          %v1223 = vpack.c.b16 %v1207, %v1207
          %v1224 = vpack.c.b16 %v1208, %v1208
          %v1225 = vpack.c.b16 %v1209, %v1209
          %v1226 = vpack.c.b16 %v1210, %v1210
          %v1227 = vpack.c.b16 %v1211, %v1211
          %v1228 = vpack.c.b16 %v1212, %v1212
          %v1229 = vpack.c.b16 %v1213, %v1213
          %v1230 = vpack.c.b16 %v1214, %v1214
          %v1231 = vpack.c.b16 %v1215, %v1215
          %v1232 = vpack.c.b16 %v1216, %v1216
          %v1233 = vpack.c.b16 %v1217, %v1217
          %v1234 = vpack.c.b16 %v1218, %v1218
          %v1235 = vpack.c.b16 %v1219, %v1219
          %v1236 = vpack.c.b16 %v1220, %v1220
          %1253 = vst [vmem:[%s394] sm:$0xf] %v1221
          %1254 = vst [vmem:[%s394 + $0x4] sm:$0xf] %v1222
          %1255 = vst [vmem:[%s394 + $0x8] sm:$0xf] %v1223
          %1256 = vst [vmem:[%s394 + $0xc] sm:$0xf] %v1224
          %1257 = vst [vmem:[%s394 + $0x10] sm:$0xf] %v1225
          %1258 = vst [vmem:[%s394 + $0x14] sm:$0xf] %v1226
          %1259 = vst [vmem:[%s394 + $0x18] sm:$0xf] %v1227
          %1260 = vst [vmem:[%s394 + $0x1c] sm:$0xf] %v1228
          %1261 = vst [vmem:[%s394 + $0x20] sm:$0xf] %v1229
          %1262 = vst [vmem:[%s394 + $0x24] sm:$0xf] %v1230
          %1263 = vst [vmem:[%s394 + $0x28] sm:$0xf] %v1231
          %1264 = vst [vmem:[%s394 + $0x2c] sm:$0xf] %v1232
          %1265 = vst [vmem:[%s394 + $0x30] sm:$0xf] %v1233
          %1266 = vst [vmem:[%s394 + $0x34] sm:$0xf] %v1234
          %1267 = vst [vmem:[%s394 + $0x38] sm:$0xf] %v1235
          %1268 = vst [vmem:[%s394 + $0x3c] sm:$0xf] %v1236
        $region93: #{fraud_gnn_forward.3} parent=80 // pred_fallthru
          _
        %s1269 = smul.u32 16, %s21
        %p1270 = scmp.lt.s32.totalorder %s1269, 31
        %s1271 = scalar_select %p1270, %s1269, 31
        %s1272 = smul.addr %s1271, 4
        %s1273 = scalar_lea.vmem %s6, %s1272
        // Predicated region
        $region94: #{fraud_gnn_forward.3} parent=80 // pred_check
          %p1274 = pneg %p185
        $region95: #{fraud_gnn_forward.3} parent=80 // pred_check_branch
          %1276 = sbr.rel (%p1274) target = $region97
        $region96: #{fraud_gnn_forward.3} parent=80 // pred_region
          %s1277 = smul.u32 16, %s21
        $region97: #{fraud_gnn_forward.3} parent=80 // pred_fallthru
          _
      $region81: #{fraud_gnn_forward.3} parent=5 // pred_fallthru
        _
      %p1278 = scmp.le.s32.totalorder 2, %s12
      // Predicated region
      $region98: #{fraud_gnn_forward.3} parent=5 // pred_check
        %p1279 = pneg %p1278
      $region99: #{fraud_gnn_forward.3} parent=5 // pred_check_branch
        %1281 = sbr.rel (%p1279) target = $region101
      $region100: #{fraud_gnn_forward.3} parent=5 // pred_region
        %s1282 = ssub.s32 %s12, 2
        // Predicated region
        $region102: #{fraud_gnn_forward.3} parent=100 // pred_check
          %p1283 = pneg %p191
        $region103: #{fraud_gnn_forward.3} parent=100 // pred_check_branch
          %1285 = sbr.rel (%p1283) target = $region105
        $region104: #{fraud_gnn_forward.3} parent=100 // pred_region
          %s1286 = smul.u32 16, %s23
          %p1287 = scmp.lt.s32.totalorder %s1286, 31
          %s1288 = scalar_select %p1287, %s1286, 31
          %s1289 = smul.addr %s1288, 4
          %s1290 = scalar_lea.vmem %s6, %s1289
        $region105: #{fraud_gnn_forward.3} parent=100 // pred_fallthru
          _
      $region101: #{fraud_gnn_forward.3} parent=5 // pred_fallthru
        _
    $region6: #{fraud_gnn_forward.3} parent=1 // loop_footer
      %s16 = sadd.s32 1, %s12
    $region7: #{fraud_gnn_forward.3} parent=1 // loop_footer_branch
      %11 = sbr.rel target = $region3
    $region8: #{fraud_gnn_forward.3} parent=1 // loop_exit
      _

</llo_original>
